<compile_context>
chip_gen: v5e
topology: v5e:2x2
jax: 0.10.0
libtpu: 0.0.40
codegen_flags: <defaults>
</compile_context>

<pallas_src>
import functools

import jax
import jax.numpy as jnp
from jax.experimental import pallas as pl
from jax.experimental.pallas import tpu as pltpu


def _round_up(v, m):
    return (v + m - 1) // m * m


def _pick_row_tile(ho, wo, target_m=256):
    """Largest TR dividing `ho` with TR*wo roughly <= target_m (>=1)."""
    tr = max(1, min(ho, max(1, target_m // max(wo, 1))))
    while ho % tr:
        tr -= 1
    return tr


# --------------------------------------------------------------------------------------
# Down-sampling layer: Conv2d(k=4, s=2, p=1) + LeakyReLU, expressed (after a wrapper-side
# space-to-depth) as a dense 2x2 stride-1 correlation over 4*Cin phase channels.
# --------------------------------------------------------------------------------------
def _down_block_kernel(xm_ref, xn_ref, w_ref, b_ref, o_ref, *, tr, wo, alpha):
    """TR output rows of the 2x2 valid conv + bias + LeakyReLU(alpha).

    xm_ref : (1, TR, Win, C)   input rows [r*TR, r*TR+TR)
    xn_ref : (1, 1,  Win, C)   input row   r*TR+TR          (window-overlap row)
    w_ref  : (2, 2*C, TCout)   per-tap-row weights, K ordered as (dx, c)
    b_ref  : (1, TCout)        bias (f32)
    o_ref  : (1, TR, Wo, TCout)
    """
    c = xm_ref.shape[-1]
    tcout = o_ref.shape[-1]

    rows0 = xm_ref[0]                                             # (TR, Win, C)
    if tr > 1:
        rows1 = jnp.concatenate([rows0[1:], xn_ref[0]], axis=0)   # rows shifted by +1
    else:
        rows1 = xn_ref[0]

    acc = jnp.zeros((tr * wo, tcout), jnp.float32)
    for dy, rows in enumerate((rows0, rows1)):
        # kw-fused LHS: K = 2*C  ->  one MXU push per tap row instead of kh*kw.
        lhs = jnp.concatenate([rows[:, 0:wo, :], rows[:, 1:wo + 1, :]], axis=-1)
        acc = acc + jnp.dot(lhs.reshape(tr * wo, 2 * c), w_ref[dy],
                            preferred_element_type=jnp.float32)
    acc = acc + b_ref[...]
    acc = jnp.where(acc > 0, acc, alpha * acc)                    # LeakyReLU(alpha)
    o_ref[0] = acc.reshape(tr, wo, tcout).astype(o_ref.dtype)


def conv4x4_s2_lrelu(x_nhwc, w_oihw, bias, *, alpha=0.01,
                     compute_dtype=jnp.float32, cout_tile=128, target_m=256):
    """Conv2d(Cin, Cout, kernel_size=4, stride=2, padding=1) + LeakyReLU(alpha), NHWC."""
    N, H, W, Cin = x_nhwc.shape
    Cout = w_oihw.shape[0]
    assert H % 2 == 0 and W % 2 == 0, "even spatial dims expected for stride-2 conv"

    # pad + space-to-depth(2): the stride-2 4x4 conv becomes a dense stride-1 2x2
    # correlation over 4*Cin phase channels (no zero work, no strided VMEM access).
    xp = jnp.pad(x_nhwc, ((0, 0), (1, 1), (1, 1), (0, 0)))
    Hin, Win = (H + 2) // 2, (W + 2) // 2                         # H/2+1, W/2+1
    P = xp.reshape(N, Hin, 2, Win, 2, Cin)
    P = jnp.transpose(P, (0, 1, 3, 2, 4, 5)).reshape(N, Hin, Win, 4 * Cin)
    P = P.astype(compute_dtype)

    C = 4 * Cin
    Ho, Wo = Hin - 1, Win - 1                                     # H/2, W/2
    Cout_pad = _round_up(Cout, 128)                               # lane-dense stores
    tcout = min(cout_tile, Cout_pad)
    assert Cout_pad % tcout == 0
    tr = _pick_row_tile(Ho, Wo, target_m)
    n_r, n_j = Ho // tr, Cout_pad // tcout

    # weights [o,i,ky,kx], ky=2*qy+ry, kx=2*qx+rx  ->  w[qy, qx*C + (ry*2Cin+rx*Cin+i), o]
    w6 = w_oihw.reshape(Cout, Cin, 2, 2, 2, 2)                    # o,i,qy,ry,qx,rx
    wt = jnp.transpose(w6, (2, 4, 3, 5, 1, 0)).reshape(2, 2 * C, Cout)
    wt = jnp.pad(wt, ((0, 0), (0, 0), (0, Cout_pad - Cout))).astype(compute_dtype)
    b2 = jnp.pad(bias.astype(jnp.float32), (0, Cout_pad - Cout)).reshape(1, Cout_pad)

    kernel = functools.partial(_down_block_kernel, tr=tr, wo=Wo, alpha=alpha)
    itemsize = jnp.dtype(compute_dtype).itemsize
    cost = pl.CostEstimate(
        flops=2 * N * Ho * Wo * 16 * Cin * Cout, transcendentals=0,
        bytes_accessed=(N * Hin * Win * C + 4 * C * Cout) * itemsize
                       + N * Ho * Wo * Cout_pad * itemsize)

    out = pl.pallas_call(
        kernel,
        grid=(N, n_r, n_j),
        in_specs=[
            pl.BlockSpec((1, tr, Win, C), lambda n, r, j: (n, r, 0, 0)),
            # one extra input row (row block size 1 -> element-addressable) for the
            # 2-row window overlap: row r*tr + tr.
            pl.BlockSpec((1, 1, Win, C), lambda n, r, j: (n, (r + 1) * tr, 0, 0)),
            pl.BlockSpec((2, 2 * C, tcout), lambda n, r, j: (0, 0, j)),
            pl.BlockSpec((1, tcout), lambda n, r, j: (0, j)),
        ],
        out_specs=pl.BlockSpec((1, tr, Wo, tcout), lambda n, r, j: (n, r, 0, j)),
        out_shape=jax.ShapeDtypeStruct((N, Ho, Wo, Cout_pad), compute_dtype),
        compiler_params=pltpu.CompilerParams(
            dimension_semantics=("parallel", "parallel", "parallel")),
        cost_estimate=cost,
    )(P, P, wt, b2)

    return out[..., :Cout]


# --------------------------------------------------------------------------------------
# Final layer: Conv2d(curr_dim, 1, k=3, s=1, p=1, bias=False).  Cout=1, so instead of
# padding the output channel to 128 lanes we do 9 VPU multiply + lane-reduce taps and
# write (N, Ho, Wo) with Wo in lanes.
# --------------------------------------------------------------------------------------
def _final_conv_kernel(x_ref, w_ref, o_ref, *, ho, wo):
    """x_ref: (1, Ho+2, Wo+2, C)  w_ref: (9, C)  o_ref: (1, Ho, Wo)."""
    acc = jnp.zeros((ho, wo), jnp.float32)
    for dy in range(3):
        for dx in range(3):
            win = x_ref[0, dy:dy + ho, dx:dx + wo, :].astype(jnp.float32)
            w_tap = w_ref[dy * 3 + dx].astype(jnp.float32).reshape(1, 1, -1)
            acc = acc + jnp.sum(win * w_tap, axis=-1)
    o_ref[0] = acc.astype(o_ref.dtype)


def conv3x3_s1_cout1(x_nhwc, w_oihw, *, compute_dtype=jnp.float32):
    N, H, W, C = x_nhwc.shape
    assert w_oihw.shape[0] == 1 and w_oihw.shape[1] == C
    xp = jnp.pad(x_nhwc.astype(compute_dtype), ((0, 0), (1, 1), (1, 1), (0, 0)))
    wt = jnp.transpose(w_oihw[0], (1, 2, 0)).reshape(9, C).astype(compute_dtype)

    kernel = functools.partial(_final_conv_kernel, ho=H, wo=W)
    itemsize = jnp.dtype(compute_dtype).itemsize
    cost = pl.CostEstimate(flops=2 * N * H * W * 9 * C, transcendentals=0,
                           bytes_accessed=(xp.size + wt.size) * itemsize + N * H * W * 4)

    return pl.pallas_call(
        kernel,
        grid=(N,),
        in_specs=[pl.BlockSpec((1, H + 2, W + 2, C), lambda n: (n, 0, 0, 0)),
                  pl.BlockSpec((9, C), lambda n: (0, 0))],
        out_specs=pl.BlockSpec((1, H, W), lambda n: (n, 0, 0)),
        out_shape=jax.ShapeDtypeStruct((N, H, W), jnp.float32),
        compiler_params=pltpu.CompilerParams(dimension_semantics=("parallel",)),
        cost_estimate=cost,
    )(xp, wt)


# --------------------------------------------------------------------------------------
# Full forward pass + pure-JAX reference.
# --------------------------------------------------------------------------------------
@functools.partial(jax.jit, static_argnames="compute_dtype")
def nlayer_discriminator(x_nchw, params, *, compute_dtype=jnp.float32):
    """Forward pass of NLayerDiscriminator.  x_nchw: [N, 3, H, W] float32."""
    x = jnp.transpose(x_nchw, (0, 2, 3, 1)).astype(jnp.float32)     # NHWC
    for (w, b) in params["down"]:
        x = conv4x4_s2_lrelu(x, w, b, compute_dtype=compute_dtype)
    out = conv3x3_s1_cout1(x, params["conv1_w"], compute_dtype=compute_dtype)
    return out[:, None]                                             # [N, 1, H', W']


def _reference_forward(x_nchw, params, compute_dtype=jnp.float32):
    """Pure-JAX (XLA conv) reference; compute_dtype mimics the kernel's operand dtype."""
    x = x_nchw
    for (w, b) in params["down"]:
        x = jax.lax.conv_general_dilated(
            x.astype(compute_dtype), w.astype(compute_dtype),
            window_strides=(2, 2), padding=[(1, 1), (1, 1)],
            dimension_numbers=("NCHW", "OIHW", "NCHW"),
            preferred_element_type=jnp.float32)
        x = x + b.reshape(1, -1, 1, 1)
        x = jnp.where(x > 0, x, 0.01 * x)                           # LeakyReLU(0.01)
        x = x.astype(compute_dtype)        # intermediate activations in compute_dtype
    x = jax.lax.conv_general_dilated(
        x.astype(compute_dtype), params["conv1_w"].astype(compute_dtype),
        window_strides=(1, 1), padding=[(1, 1), (1, 1)],
        dimension_numbers=("NCHW", "OIHW", "NCHW"),
        preferred_element_type=jnp.float32)
    return x


if __name__ == "__main__":
    key = jax.random.PRNGKey(0)
    # Small shapes consistent with the module: image_size=16, conv_dim=8, repeat_num=3.
    N, image_size, conv_dim, repeat_num = 2, 16, 8, 3

    cins, couts = [3], [conv_dim]
    for _ in range(1, repeat_num):
        cins.append(couts[-1])
        couts.append(couts[-1] * 2)

    down = []
    for cin, cout in zip(cins, couts):
        key, kw_, kb_ = jax.random.split(key, 3)
        w = 0.2 * jax.random.normal(kw_, (cout, cin, 4, 4), jnp.float32)
        b = 0.1 * jax.random.normal(kb_, (cout,), jnp.float32)
        down.append((w, b))
    key, kw1, kx = jax.random.split(key, 3)
    conv1_w = 0.2 * jax.random.normal(kw1, (1, couts[-1], 3, 3), jnp.float32)
    params = {"down": down, "conv1_w": conv1_w}

    x = jax.random.normal(kx, (N, 3, image_size, image_size), jnp.float32)

    # f32 MXU operands: tight check against the XLA-conv reference.
    ref_f32 = _reference_forward(x, params, jnp.float32)
    out_f32 = jax.block_until_ready(
        nlayer_discriminator(x, params, compute_dtype=jnp.float32))
    ok_f32 = bool(jnp.allclose(out_f32, ref_f32, atol=2e-3, rtol=2e-3))

    # bf16 MXU operands (fast path): checked against a bf16-cast reference that mirrors
    # the kernel's bf16 operands and bf16 intermediate activations (f32 accumulation).
    ref_bf16 = _reference_forward(x, params, jnp.bfloat16)
    out_bf16 = jax.block_until_ready(
        nlayer_discriminator(x, params, compute_dtype=jnp.bfloat16))
    ok_bf16 = bool(jnp.allclose(out_bf16, ref_bf16, atol=5e-2, rtol=5e-2))

    if ok_f32 and ok_bf16:
        print("KERNEL_OK")
    else:
        if not ok_f32:
            print("f32 mismatch: max abs err %.3e"
                  % float(jnp.max(jnp.abs(out_f32 - ref_f32))))
        if not ok_bf16:
            print("bf16 mismatch: max abs err %.3e"
                  % float(jnp.max(jnp.abs(out_bf16 - ref_bf16))))
</pallas_src>

<mosaic_0001>
module attributes {stable_mosaic.version = 11 : i64} {
  func.func @_down_block_kernel(%arg0: i32, %arg1: i32, %arg2: i32, %arg3: memref<1x8x9x12xf32, #tpu.memory_space<vmem>>, %arg4: memref<1x1x9x12xf32, #tpu.memory_space<vmem>>, %arg5: memref<2x24x128xf32, #tpu.memory_space<vmem>>, %arg6: memref<1x128xf32, #tpu.memory_space<vmem>>, %arg7: memref<1x8x8x128xf32, #tpu.memory_space<vmem>>) attributes {dimension_semantics = [#tpu.dimension_semantics<parallel>, #tpu.dimension_semantics<parallel>, #tpu.dimension_semantics<parallel>], iteration_bounds = array<i64: 2, 1, 1>, scalar_prefetch = 0 : i64, scratch_operands = 0 : i64, tpu.core_type = #tpu.core_type<tc>, window_params = [{transform_indices = @transform_0, window_bounds = array<i64: 1, 8, 9, 12>}, {transform_indices = @transform_1, window_bounds = array<i64: 1, 1, 9, 12>}, {transform_indices = @transform_2, window_bounds = array<i64: 2, 24, 128>}, {transform_indices = @transform_3, window_bounds = array<i64: 1, 128>}, {transform_indices = @transform_4, window_bounds = array<i64: 1, 8, 8, 128>}]} {
    %c0 = arith.constant 0 : index
    %c0_0 = arith.constant 0 : index
    %c0_1 = arith.constant 0 : index
    %c0_2 = arith.constant 0 : index
    %0 = vector.load %arg3[%c0, %c0_0, %c0_1, %c0_2] : memref<1x8x9x12xf32, #tpu.memory_space<vmem>>, vector<1x8x9x12xf32>
    %1 = vector.shape_cast %0 : vector<1x8x9x12xf32> to vector<8x9x12xf32>
    %2 = vector.extract_strided_slice %1 {offsets = [1, 0, 0], sizes = [7, 9, 12], strides = [1, 1, 1]} : vector<8x9x12xf32> to vector<7x9x12xf32>
    %c0_3 = arith.constant 0 : index
    %c0_4 = arith.constant 0 : index
    %c0_5 = arith.constant 0 : index
    %c0_6 = arith.constant 0 : index
    %3 = vector.load %arg4[%c0_3, %c0_4, %c0_5, %c0_6] : memref<1x1x9x12xf32, #tpu.memory_space<vmem>>, vector<1x1x9x12xf32>
    %4 = vector.shape_cast %3 : vector<1x1x9x12xf32> to vector<1x9x12xf32>
    %5 = tpu.concatenate %2, %4 in 0 : vector<7x9x12xf32>, vector<1x9x12xf32> -> vector<8x9x12xf32>
    %cst = arith.constant 0.000000e+00 : f32
    %6 = vector.broadcast %cst : f32 to vector<64x128xf32>
    %7 = vector.extract_strided_slice %1 {offsets = [0, 0, 0], sizes = [8, 8, 12], strides = [1, 1, 1]} : vector<8x9x12xf32> to vector<8x8x12xf32>
    %8 = vector.extract_strided_slice %1 {offsets = [0, 1, 0], sizes = [8, 8, 12], strides = [1, 1, 1]} : vector<8x9x12xf32> to vector<8x8x12xf32>
    %9 = tpu.concatenate %7, %8 in 2 : vector<8x8x12xf32>, vector<8x8x12xf32> -> vector<8x8x24xf32>
    %10 = vector.shape_cast %9 : vector<8x8x24xf32> to vector<64x24xf32>
    %c0_7 = arith.constant 0 : index
    %c0_8 = arith.constant 0 : index
    %c0_9 = arith.constant 0 : index
    %11 = vector.load %arg5[%c0_7, %c0_8, %c0_9] : memref<2x24x128xf32, #tpu.memory_space<vmem>>, vector<1x24x128xf32>
    %12 = vector.shape_cast %11 : vector<1x24x128xf32> to vector<24x128xf32>
    %cst_10 = arith.constant dense<0.000000e+00> : vector<64x128xf32>
    %13 = tpu.matmul %10, %12, %cst_10 {dimension_numbers = #tpu.dot_dimension_numbers<[1], [0], [0], [1], [0, 0, 1, 1], [], []>} : vector<64x24xf32>, vector<24x128xf32>, vector<64x128xf32> -> vector<64x128xf32>
    %14 = arith.addf %6, %13 : vector<64x128xf32>
    %15 = vector.extract_strided_slice %5 {offsets = [0, 0, 0], sizes = [8, 8, 12], strides = [1, 1, 1]} : vector<8x9x12xf32> to vector<8x8x12xf32>
    %16 = vector.extract_strided_slice %5 {offsets = [0, 1, 0], sizes = [8, 8, 12], strides = [1, 1, 1]} : vector<8x9x12xf32> to vector<8x8x12xf32>
    %17 = tpu.concatenate %15, %16 in 2 : vector<8x8x12xf32>, vector<8x8x12xf32> -> vector<8x8x24xf32>
    %18 = vector.shape_cast %17 : vector<8x8x24xf32> to vector<64x24xf32>
    %c1 = arith.constant 1 : index
    %c0_11 = arith.constant 0 : index
    %c0_12 = arith.constant 0 : index
    %19 = vector.load %arg5[%c1, %c0_11, %c0_12] : memref<2x24x128xf32, #tpu.memory_space<vmem>>, vector<1x24x128xf32>
    %20 = vector.shape_cast %19 : vector<1x24x128xf32> to vector<24x128xf32>
    %cst_13 = arith.constant dense<0.000000e+00> : vector<64x128xf32>
    %21 = tpu.matmul %18, %20, %cst_13 {dimension_numbers = #tpu.dot_dimension_numbers<[1], [0], [0], [1], [0, 0, 1, 1], [], []>} : vector<64x24xf32>, vector<24x128xf32>, vector<64x128xf32> -> vector<64x128xf32>
    %22 = arith.addf %14, %21 : vector<64x128xf32>
    %c0_14 = arith.constant 0 : index
    %c0_15 = arith.constant 0 : index
    %23 = vector.load %arg6[%c0_14, %c0_15] : memref<1x128xf32, #tpu.memory_space<vmem>>, vector<1x128xf32>
    %24 = vector.broadcast %23 : vector<1x128xf32> to vector<64x128xf32>
    %25 = arith.addf %22, %24 : vector<64x128xf32>
    %cst_16 = arith.constant 0.000000e+00 : f32
    %26 = vector.broadcast %cst_16 : f32 to vector<64x128xf32>
    %27 = arith.cmpf ogt, %25, %26 : vector<64x128xf32>
    %cst_17 = arith.constant 0.00999999977 : f32
    %28 = vector.broadcast %cst_17 : f32 to vector<64x128xf32>
    %29 = arith.mulf %28, %25 : vector<64x128xf32>
    %30 = arith.select %27, %25, %29 : vector<64x128xi1>, vector<64x128xf32>
    %31 = vector.shape_cast %30 : vector<64x128xf32> to vector<8x8x128xf32>
    %c0_18 = arith.constant 0 : index
    %c0_19 = arith.constant 0 : index
    %c0_20 = arith.constant 0 : index
    %c0_21 = arith.constant 0 : index
    %32 = vector.load %arg7[%c0_18, %c0_19, %c0_20, %c0_21] : memref<1x8x8x128xf32, #tpu.memory_space<vmem>>, vector<1x8x8x128xf32>
    %33 = vector.shape_cast %32 : vector<1x8x8x128xf32> to vector<8x8x128xf32>
    %34 = vector.shape_cast %31 : vector<8x8x128xf32> to vector<1x8x8x128xf32>
    tpu.vector_store %arg7[%c0_18, %c0_19, %c0_20, %c0_21], %34 {strides = array<i32>} : memref<1x8x8x128xf32, #tpu.memory_space<vmem>>, vector<1x8x8x128xf32>,
    return
  }
  func.func @transform_0(%arg0: i32, %arg1: i32, %arg2: i32) -> (i32, i32, i32, i32) {
    %c0_i32 = arith.constant 0 : i32
    %c0_i32_0 = arith.constant 0 : i32
    %c0_i32_1 = arith.constant 0 : i32
    return %arg0, %arg1, %c0_i32, %c0_i32_0 : i32, i32, i32, i32
  }
  func.func @transform_1(%arg0: i32, %arg1: i32, %arg2: i32) -> (i32, i32, i32, i32) {
    %c1_i32 = arith.constant 1 : i32
    %0 = arith.addi %arg1, %c1_i32 : i32
    %c8_i32 = arith.constant 8 : i32
    %1 = arith.muli %0, %c8_i32 : i32
    %c0_i32 = arith.constant 0 : i32
    %c0_i32_0 = arith.constant 0 : i32
    %c0_i32_1 = arith.constant 0 : i32
    return %arg0, %1, %c0_i32, %c0_i32_0 : i32, i32, i32, i32
  }
  func.func @transform_2(%arg0: i32, %arg1: i32, %arg2: i32) -> (i32, i32, i32) {
    %c0_i32 = arith.constant 0 : i32
    %c0_i32_0 = arith.constant 0 : i32
    %c0_i32_1 = arith.constant 0 : i32
    return %c0_i32, %c0_i32_0, %arg2 : i32, i32, i32
  }
  func.func @transform_3(%arg0: i32, %arg1: i32, %arg2: i32) -> (i32, i32) {
    %c0_i32 = arith.constant 0 : i32
    %c0_i32_0 = arith.constant 0 : i32
    return %c0_i32, %arg2 : i32, i32
  }
  func.func @transform_4(%arg0: i32, %arg1: i32, %arg2: i32) -> (i32, i32, i32, i32) {
    %c0_i32 = arith.constant 0 : i32
    %c0_i32_0 = arith.constant 0 : i32
    return %arg0, %arg1, %c0_i32, %arg2 : i32, i32, i32, i32
  }
}

module attributes {stable_mosaic.version = 11 : i64} {
  func.func @_down_block_kernel(%arg0: i32, %arg1: i32, %arg2: i32, %arg3: memref<1x4x5x32xf32, #tpu.memory_space<vmem>>, %arg4: memref<1x1x5x32xf32, #tpu.memory_space<vmem>>, %arg5: memref<2x64x128xf32, #tpu.memory_space<vmem>>, %arg6: memref<1x128xf32, #tpu.memory_space<vmem>>, %arg7: memref<1x4x4x128xf32, #tpu.memory_space<vmem>>) attributes {dimension_semantics = [#tpu.dimension_semantics<parallel>, #tpu.dimension_semantics<parallel>, #tpu.dimension_semantics<parallel>], iteration_bounds = array<i64: 2, 1, 1>, scalar_prefetch = 0 : i64, scratch_operands = 0 : i64, tpu.core_type = #tpu.core_type<tc>, window_params = [{transform_indices = @transform_0, window_bounds = array<i64: 1, 4, 5, 32>}, {transform_indices = @transform_1, window_bounds = array<i64: 1, 1, 5, 32>}, {transform_indices = @transform_2, window_bounds = array<i64: 2, 64, 128>}, {transform_indices = @transform_3, window_bounds = array<i64: 1, 128>}, {transform_indices = @transform_4, window_bounds = array<i64: 1, 4, 4, 128>}]} {
    %c0 = arith.constant 0 : index
    %c0_0 = arith.constant 0 : index
    %c0_1 = arith.constant 0 : index
    %c0_2 = arith.constant 0 : index
    %0 = vector.load %arg3[%c0, %c0_0, %c0_1, %c0_2] : memref<1x4x5x32xf32, #tpu.memory_space<vmem>>, vector<1x4x5x32xf32>
    %1 = vector.shape_cast %0 : vector<1x4x5x32xf32> to vector<4x5x32xf32>
    %2 = vector.extract_strided_slice %1 {offsets = [1, 0, 0], sizes = [3, 5, 32], strides = [1, 1, 1]} : vector<4x5x32xf32> to vector<3x5x32xf32>
    %c0_3 = arith.constant 0 : index
    %c0_4 = arith.constant 0 : index
    %c0_5 = arith.constant 0 : index
    %c0_6 = arith.constant 0 : index
    %3 = vector.load %arg4[%c0_3, %c0_4, %c0_5, %c0_6] : memref<1x1x5x32xf32, #tpu.memory_space<vmem>>, vector<1x1x5x32xf32>
    %4 = vector.shape_cast %3 : vector<1x1x5x32xf32> to vector<1x5x32xf32>
    %5 = tpu.concatenate %2, %4 in 0 : vector<3x5x32xf32>, vector<1x5x32xf32> -> vector<4x5x32xf32>
    %cst = arith.constant 0.000000e+00 : f32
    %6 = vector.broadcast %cst : f32 to vector<16x128xf32>
    %7 = vector.extract_strided_slice %1 {offsets = [0, 0, 0], sizes = [4, 4, 32], strides = [1, 1, 1]} : vector<4x5x32xf32> to vector<4x4x32xf32>
    %8 = vector.extract_strided_slice %1 {offsets = [0, 1, 0], sizes = [4, 4, 32], strides = [1, 1, 1]} : vector<4x5x32xf32> to vector<4x4x32xf32>
    %9 = tpu.concatenate %7, %8 in 2 : vector<4x4x32xf32>, vector<4x4x32xf32> -> vector<4x4x64xf32>
    %10 = vector.shape_cast %9 : vector<4x4x64xf32> to vector<16x64xf32>
    %c0_7 = arith.constant 0 : index
    %c0_8 = arith.constant 0 : index
    %c0_9 = arith.constant 0 : index
    %11 = vector.load %arg5[%c0_7, %c0_8, %c0_9] : memref<2x64x128xf32, #tpu.memory_space<vmem>>, vector<1x64x128xf32>
    %12 = vector.shape_cast %11 : vector<1x64x128xf32> to vector<64x128xf32>
    %cst_10 = arith.constant dense<0.000000e+00> : vector<16x128xf32>
    %13 = tpu.matmul %10, %12, %cst_10 {dimension_numbers = #tpu.dot_dimension_numbers<[1], [0], [0], [1], [0, 0, 1, 1], [], []>} : vector<16x64xf32>, vector<64x128xf32>, vector<16x128xf32> -> vector<16x128xf32>
    %14 = arith.addf %6, %13 : vector<16x128xf32>
    %15 = vector.extract_strided_slice %5 {offsets = [0, 0, 0], sizes = [4, 4, 32], strides = [1, 1, 1]} : vector<4x5x32xf32> to vector<4x4x32xf32>
    %16 = vector.extract_strided_slice %5 {offsets = [0, 1, 0], sizes = [4, 4, 32], strides = [1, 1, 1]} : vector<4x5x32xf32> to vector<4x4x32xf32>
    %17 = tpu.concatenate %15, %16 in 2 : vector<4x4x32xf32>, vector<4x4x32xf32> -> vector<4x4x64xf32>
    %18 = vector.shape_cast %17 : vector<4x4x64xf32> to vector<16x64xf32>
    %c1 = arith.constant 1 : index
    %c0_11 = arith.constant 0 : index
    %c0_12 = arith.constant 0 : index
    %19 = vector.load %arg5[%c1, %c0_11, %c0_12] : memref<2x64x128xf32, #tpu.memory_space<vmem>>, vector<1x64x128xf32>
    %20 = vector.shape_cast %19 : vector<1x64x128xf32> to vector<64x128xf32>
    %cst_13 = arith.constant dense<0.000000e+00> : vector<16x128xf32>
    %21 = tpu.matmul %18, %20, %cst_13 {dimension_numbers = #tpu.dot_dimension_numbers<[1], [0], [0], [1], [0, 0, 1, 1], [], []>} : vector<16x64xf32>, vector<64x128xf32>, vector<16x128xf32> -> vector<16x128xf32>
    %22 = arith.addf %14, %21 : vector<16x128xf32>
    %c0_14 = arith.constant 0 : index
    %c0_15 = arith.constant 0 : index
    %23 = vector.load %arg6[%c0_14, %c0_15] : memref<1x128xf32, #tpu.memory_space<vmem>>, vector<1x128xf32>
    %24 = vector.broadcast %23 : vector<1x128xf32> to vector<16x128xf32>
    %25 = arith.addf %22, %24 : vector<16x128xf32>
    %cst_16 = arith.constant 0.000000e+00 : f32
    %26 = vector.broadcast %cst_16 : f32 to vector<16x128xf32>
    %27 = arith.cmpf ogt, %25, %26 : vector<16x128xf32>
    %cst_17 = arith.constant 0.00999999977 : f32
    %28 = vector.broadcast %cst_17 : f32 to vector<16x128xf32>
    %29 = arith.mulf %28, %25 : vector<16x128xf32>
    %30 = arith.select %27, %25, %29 : vector<16x128xi1>, vector<16x128xf32>
    %31 = vector.shape_cast %30 : vector<16x128xf32> to vector<4x4x128xf32>
    %c0_18 = arith.constant 0 : index
    %c0_19 = arith.constant 0 : index
    %c0_20 = arith.constant 0 : index
    %c0_21 = arith.constant 0 : index
    %32 = vector.load %arg7[%c0_18, %c0_19, %c0_20, %c0_21] : memref<1x4x4x128xf32, #tpu.memory_space<vmem>>, vector<1x4x4x128xf32>
    %33 = vector.shape_cast %32 : vector<1x4x4x128xf32> to vector<4x4x128xf32>
    %34 = vector.shape_cast %31 : vector<4x4x128xf32> to vector<1x4x4x128xf32>
    tpu.vector_store %arg7[%c0_18, %c0_19, %c0_20, %c0_21], %34 {strides = array<i32>} : memref<1x4x4x128xf32, #tpu.memory_space<vmem>>, vector<1x4x4x128xf32>,
    return
  }
  func.func @transform_0(%arg0: i32, %arg1: i32, %arg2: i32) -> (i32, i32, i32, i32) {
    %c0_i32 = arith.constant 0 : i32
    %c0_i32_0 = arith.constant 0 : i32
    %c0_i32_1 = arith.constant 0 : i32
    return %arg0, %arg1, %c0_i32, %c0_i32_0 : i32, i32, i32, i32
  }
  func.func @transform_1(%arg0: i32, %arg1: i32, %arg2: i32) -> (i32, i32, i32, i32) {
    %c1_i32 = arith.constant 1 : i32
    %0 = arith.addi %arg1, %c1_i32 : i32
    %c4_i32 = arith.constant 4 : i32
    %1 = arith.muli %0, %c4_i32 : i32
    %c0_i32 = arith.constant 0 : i32
    %c0_i32_0 = arith.constant 0 : i32
    %c0_i32_1 = arith.constant 0 : i32
    return %arg0, %1, %c0_i32, %c0_i32_0 : i32, i32, i32, i32
  }
  func.func @transform_2(%arg0: i32, %arg1: i32, %arg2: i32) -> (i32, i32, i32) {
    %c0_i32 = arith.constant 0 : i32
    %c0_i32_0 = arith.constant 0 : i32
    %c0_i32_1 = arith.constant 0 : i32
    return %c0_i32, %c0_i32_0, %arg2 : i32, i32, i32
  }
  func.func @transform_3(%arg0: i32, %arg1: i32, %arg2: i32) -> (i32, i32) {
    %c0_i32 = arith.constant 0 : i32
    %c0_i32_0 = arith.constant 0 : i32
    return %c0_i32, %arg2 : i32, i32
  }
  func.func @transform_4(%arg0: i32, %arg1: i32, %arg2: i32) -> (i32, i32, i32, i32) {
    %c0_i32 = arith.constant 0 : i32
    %c0_i32_0 = arith.constant 0 : i32
    return %arg0, %arg1, %c0_i32, %arg2 : i32, i32, i32, i32
  }
}

module attributes {stable_mosaic.version = 11 : i64} {
  func.func @_final_conv_kernel(%arg0: i32, %arg1: memref<1x4x4x32xf32, #tpu.memory_space<vmem>>, %arg2: memref<9x32xf32, #tpu.memory_space<vmem>>, %arg3: memref<1x2x2xf32, #tpu.memory_space<vmem>>) attributes {dimension_semantics = [#tpu.dimension_semantics<parallel>], iteration_bounds = array<i64: 2>, scalar_prefetch = 0 : i64, scratch_operands = 0 : i64, tpu.core_type = #tpu.core_type<tc>, window_params = [{transform_indices = @transform_0, window_bounds = array<i64: 1, 4, 4, 32>}, {pipeline_mode = #tpu.pipeline_mode<synchronous>, transform_indices = @transform_1, window_bounds = array<i64: 9, 32>}, {transform_indices = @transform_2, window_bounds = array<i64: 1, 2, 2>}]} {
    %cst = arith.constant 0.000000e+00 : f32
    %0 = vector.broadcast %cst : f32 to vector<2x2xf32>
    %c0 = arith.constant 0 : index
    %c0_0 = arith.constant 0 : index
    %c0_1 = arith.constant 0 : index
    %c0_2 = arith.constant 0 : index
    %1 = vector.load %arg1[%c0, %c0_0, %c0_1, %c0_2] : memref<1x4x4x32xf32, #tpu.memory_space<vmem>>, vector<1x2x2x32xf32>
    %2 = vector.shape_cast %1 : vector<1x2x2x32xf32> to vector<2x2x32xf32>
    %c0_3 = arith.constant 0 : index
    %c0_4 = arith.constant 0 : index
    %3 = vector.load %arg2[%c0_3, %c0_4] : memref<9x32xf32, #tpu.memory_space<vmem>>, vector<1x32xf32>
    %4 = vector.shape_cast %3 : vector<1x32xf32> to vector<32xf32>
    %5 = vector.shape_cast %4 : vector<32xf32> to vector<1x1x32xf32>
    %6 = vector.broadcast %5 : vector<1x1x32xf32> to vector<2x2x32xf32>
    %7 = arith.mulf %2, %6 : vector<2x2x32xf32>
    %cst_5 = arith.constant dense<0.000000e+00> : vector<2x2xf32>
    %8 = vector.multi_reduction <add>, %7, %cst_5 [2] : vector<2x2x32xf32> to vector<2x2xf32>
    %9 = arith.addf %0, %8 : vector<2x2xf32>
    %c0_6 = arith.constant 0 : index
    %c0_7 = arith.constant 0 : index
    %c1 = arith.constant 1 : index
    %c0_8 = arith.constant 0 : index
    %10 = vector.load %arg1[%c0_6, %c0_7, %c1, %c0_8] : memref<1x4x4x32xf32, #tpu.memory_space<vmem>>, vector<1x2x2x32xf32>
    %11 = vector.shape_cast %10 : vector<1x2x2x32xf32> to vector<2x2x32xf32>
    %c1_9 = arith.constant 1 : index
    %c0_10 = arith.constant 0 : index
    %12 = vector.load %arg2[%c1_9, %c0_10] : memref<9x32xf32, #tpu.memory_space<vmem>>, vector<1x32xf32>
    %13 = vector.shape_cast %12 : vector<1x32xf32> to vector<32xf32>
    %14 = vector.shape_cast %13 : vector<32xf32> to vector<1x1x32xf32>
    %15 = vector.broadcast %14 : vector<1x1x32xf32> to vector<2x2x32xf32>
    %16 = arith.mulf %11, %15 : vector<2x2x32xf32>
    %cst_11 = arith.constant dense<0.000000e+00> : vector<2x2xf32>
    %17 = vector.multi_reduction <add>, %16, %cst_11 [2] : vector<2x2x32xf32> to vector<2x2xf32>
    %18 = arith.addf %9, %17 : vector<2x2xf32>
    %c0_12 = arith.constant 0 : index
    %c0_13 = arith.constant 0 : index
    %c2 = arith.constant 2 : index
    %c0_14 = arith.constant 0 : index
    %19 = vector.load %arg1[%c0_12, %c0_13, %c2, %c0_14] : memref<1x4x4x32xf32, #tpu.memory_space<vmem>>, vector<1x2x2x32xf32>
    %20 = vector.shape_cast %19 : vector<1x2x2x32xf32> to vector<2x2x32xf32>
    %c2_15 = arith.constant 2 : index
    %c0_16 = arith.constant 0 : index
    %21 = vector.load %arg2[%c2_15, %c0_16] : memref<9x32xf32, #tpu.memory_space<vmem>>, vector<1x32xf32>
    %22 = vector.shape_cast %21 : vector<1x32xf32> to vector<32xf32>
    %23 = vector.shape_cast %22 : vector<32xf32> to vector<1x1x32xf32>
    %24 = vector.broadcast %23 : vector<1x1x32xf32> to vector<2x2x32xf32>
    %25 = arith.mulf %20, %24 : vector<2x2x32xf32>
    %cst_17 = arith.constant dense<0.000000e+00> : vector<2x2xf32>
    %26 = vector.multi_reduction <add>, %25, %cst_17 [2] : vector<2x2x32xf32> to vector<2x2xf32>
    %27 = arith.addf %18, %26 : vector<2x2xf32>
    %c0_18 = arith.constant 0 : index
    %c1_19 = arith.constant 1 : index
    %c0_20 = arith.constant 0 : index
    %c0_21 = arith.constant 0 : index
    %28 = vector.load %arg1[%c0_18, %c1_19, %c0_20, %c0_21] : memref<1x4x4x32xf32, #tpu.memory_space<vmem>>, vector<1x2x2x32xf32>
    %29 = vector.shape_cast %28 : vector<1x2x2x32xf32> to vector<2x2x32xf32>
    %c3 = arith.constant 3 : index
    %c0_22 = arith.constant 0 : index
    %30 = vector.load %arg2[%c3, %c0_22] : memref<9x32xf32, #tpu.memory_space<vmem>>, vector<1x32xf32>
    %31 = vector.shape_cast %30 : vector<1x32xf32> to vector<32xf32>
    %32 = vector.shape_cast %31 : vector<32xf32> to vector<1x1x32xf32>
    %33 = vector.broadcast %32 : vector<1x1x32xf32> to vector<2x2x32xf32>
    %34 = arith.mulf %29, %33 : vector<2x2x32xf32>
    %cst_23 = arith.constant dense<0.000000e+00> : vector<2x2xf32>
    %35 = vector.multi_reduction <add>, %34, %cst_23 [2] : vector<2x2x32xf32> to vector<2x2xf32>
    %36 = arith.addf %27, %35 : vector<2x2xf32>
    %c0_24 = arith.constant 0 : index
    %c1_25 = arith.constant 1 : index
    %c1_26 = arith.constant 1 : index
    %c0_27 = arith.constant 0 : index
    %37 = vector.load %arg1[%c0_24, %c1_25, %c1_26, %c0_27] : memref<1x4x4x32xf32, #tpu.memory_space<vmem>>, vector<1x2x2x32xf32>
    %38 = vector.shape_cast %37 : vector<1x2x2x32xf32> to vector<2x2x32xf32>
    %c4 = arith.constant 4 : index
    %c0_28 = arith.constant 0 : index
    %39 = vector.load %arg2[%c4, %c0_28] : memref<9x32xf32, #tpu.memory_space<vmem>>, vector<1x32xf32>
    %40 = vector.shape_cast %39 : vector<1x32xf32> to vector<32xf32>
    %41 = vector.shape_cast %40 : vector<32xf32> to vector<1x1x32xf32>
    %42 = vector.broadcast %41 : vector<1x1x32xf32> to vector<2x2x32xf32>
    %43 = arith.mulf %38, %42 : vector<2x2x32xf32>
    %cst_29 = arith.constant dense<0.000000e+00> : vector<2x2xf32>
    %44 = vector.multi_reduction <add>, %43, %cst_29 [2] : vector<2x2x32xf32> to vector<2x2xf32>
    %45 = arith.addf %36, %44 : vector<2x2xf32>
    %c0_30 = arith.constant 0 : index
    %c1_31 = arith.constant 1 : index
    %c2_32 = arith.constant 2 : index
    %c0_33 = arith.constant 0 : index
    %46 = vector.load %arg1[%c0_30, %c1_31, %c2_32, %c0_33] : memref<1x4x4x32xf32, #tpu.memory_space<vmem>>, vector<1x2x2x32xf32>
    %47 = vector.shape_cast %46 : vector<1x2x2x32xf32> to vector<2x2x32xf32>
    %c5 = arith.constant 5 : index
    %c0_34 = arith.constant 0 : index
    %48 = vector.load %arg2[%c5, %c0_34] : memref<9x32xf32, #tpu.memory_space<vmem>>, vector<1x32xf32>
    %49 = vector.shape_cast %48 : vector<1x32xf32> to vector<32xf32>
    %50 = vector.shape_cast %49 : vector<32xf32> to vector<1x1x32xf32>
    %51 = vector.broadcast %50 : vector<1x1x32xf32> to vector<2x2x32xf32>
    %52 = arith.mulf %47, %51 : vector<2x2x32xf32>
    %cst_35 = arith.constant dense<0.000000e+00> : vector<2x2xf32>
    %53 = vector.multi_reduction <add>, %52, %cst_35 [2] : vector<2x2x32xf32> to vector<2x2xf32>
    %54 = arith.addf %45, %53 : vector<2x2xf32>
    %c0_36 = arith.constant 0 : index
    %c2_37 = arith.constant 2 : index
    %c0_38 = arith.constant 0 : index
    %c0_39 = arith.constant 0 : index
    %55 = vector.load %arg1[%c0_36, %c2_37, %c0_38, %c0_39] : memref<1x4x4x32xf32, #tpu.memory_space<vmem>>, vector<1x2x2x32xf32>
    %56 = vector.shape_cast %55 : vector<1x2x2x32xf32> to vector<2x2x32xf32>
    %c6 = arith.constant 6 : index
    %c0_40 = arith.constant 0 : index
    %57 = vector.load %arg2[%c6, %c0_40] : memref<9x32xf32, #tpu.memory_space<vmem>>, vector<1x32xf32>
    %58 = vector.shape_cast %57 : vector<1x32xf32> to vector<32xf32>
    %59 = vector.shape_cast %58 : vector<32xf32> to vector<1x1x32xf32>
    %60 = vector.broadcast %59 : vector<1x1x32xf32> to vector<2x2x32xf32>
    %61 = arith.mulf %56, %60 : vector<2x2x32xf32>
    %cst_41 = arith.constant dense<0.000000e+00> : vector<2x2xf32>
    %62 = vector.multi_reduction <add>, %61, %cst_41 [2] : vector<2x2x32xf32> to vector<2x2xf32>
    %63 = arith.addf %54, %62 : vector<2x2xf32>
    %c0_42 = arith.constant 0 : index
    %c2_43 = arith.constant 2 : index
    %c1_44 = arith.constant 1 : index
    %c0_45 = arith.constant 0 : index
    %64 = vector.load %arg1[%c0_42, %c2_43, %c1_44, %c0_45] : memref<1x4x4x32xf32, #tpu.memory_space<vmem>>, vector<1x2x2x32xf32>
    %65 = vector.shape_cast %64 : vector<1x2x2x32xf32> to vector<2x2x32xf32>
    %c7 = arith.constant 7 : index
    %c0_46 = arith.constant 0 : index
    %66 = vector.load %arg2[%c7, %c0_46] : memref<9x32xf32, #tpu.memory_space<vmem>>, vector<1x32xf32>
    %67 = vector.shape_cast %66 : vector<1x32xf32> to vector<32xf32>
    %68 = vector.shape_cast %67 : vector<32xf32> to vector<1x1x32xf32>
    %69 = vector.broadcast %68 : vector<1x1x32xf32> to vector<2x2x32xf32>
    %70 = arith.mulf %65, %69 : vector<2x2x32xf32>
    %cst_47 = arith.constant dense<0.000000e+00> : vector<2x2xf32>
    %71 = vector.multi_reduction <add>, %70, %cst_47 [2] : vector<2x2x32xf32> to vector<2x2xf32>
    %72 = arith.addf %63, %71 : vector<2x2xf32>
    %c0_48 = arith.constant 0 : index
    %c2_49 = arith.constant 2 : index
    %c2_50 = arith.constant 2 : index
    %c0_51 = arith.constant 0 : index
    %73 = vector.load %arg1[%c0_48, %c2_49, %c2_50, %c0_51] : memref<1x4x4x32xf32, #tpu.memory_space<vmem>>, vector<1x2x2x32xf32>
    %74 = vector.shape_cast %73 : vector<1x2x2x32xf32> to vector<2x2x32xf32>
    %c8 = arith.constant 8 : index
    %c0_52 = arith.constant 0 : index
    %75 = vector.load %arg2[%c8, %c0_52] : memref<9x32xf32, #tpu.memory_space<vmem>>, vector<1x32xf32>
    %76 = vector.shape_cast %75 : vector<1x32xf32> to vector<32xf32>
    %77 = vector.shape_cast %76 : vector<32xf32> to vector<1x1x32xf32>
    %78 = vector.broadcast %77 : vector<1x1x32xf32> to vector<2x2x32xf32>
    %79 = arith.mulf %74, %78 : vector<2x2x32xf32>
    %cst_53 = arith.constant dense<0.000000e+00> : vector<2x2xf32>
    %80 = vector.multi_reduction <add>, %79, %cst_53 [2] : vector<2x2x32xf32> to vector<2x2xf32>
    %81 = arith.addf %72, %80 : vector<2x2xf32>
    %c0_54 = arith.constant 0 : index
    %c0_55 = arith.constant 0 : index
    %c0_56 = arith.constant 0 : index
    %82 = vector.load %arg3[%c0_54, %c0_55, %c0_56] : memref<1x2x2xf32, #tpu.memory_space<vmem>>, vector<1x2x2xf32>
    %83 = vector.shape_cast %82 : vector<1x2x2xf32> to vector<2x2xf32>
    %84 = vector.shape_cast %81 : vector<2x2xf32> to vector<1x2x2xf32>
    tpu.vector_store %arg3[%c0_54, %c0_55, %c0_56], %84 {strides = array<i32>} : memref<1x2x2xf32, #tpu.memory_space<vmem>>, vector<1x2x2xf32>,
    return
  }
  func.func @transform_0(%arg0: i32) -> (i32, i32, i32, i32) {
    %c0_i32 = arith.constant 0 : i32
    %c0_i32_0 = arith.constant 0 : i32
    %c0_i32_1 = arith.constant 0 : i32
    %c0_i32_2 = arith.constant 0 : i32
    return %arg0, %c0_i32, %c0_i32_0, %c0_i32_1 : i32, i32, i32, i32
  }
  func.func @transform_1(%arg0: i32) -> (i32, i32) {
    %c0_i32 = arith.constant 0 : i32
    %c0_i32_0 = arith.constant 0 : i32
    %c0_i32_1 = arith.constant 0 : i32
    return %c0_i32, %c0_i32_0 : i32, i32
  }
  func.func @transform_2(%arg0: i32) -> (i32, i32, i32) {
    %c0_i32 = arith.constant 0 : i32
    %c0_i32_0 = arith.constant 0 : i32
    %c0_i32_1 = arith.constant 0 : i32
    return %arg0, %c0_i32, %c0_i32_0 : i32, i32, i32
  }
}

module attributes {stable_mosaic.version = 11 : i64} {
  func.func @_down_block_kernel(%arg0: i32, %arg1: i32, %arg2: i32, %arg3: memref<1x2x3x64xf32, #tpu.memory_space<vmem>>, %arg4: memref<1x1x3x64xf32, #tpu.memory_space<vmem>>, %arg5: memref<2x128x128xf32, #tpu.memory_space<vmem>>, %arg6: memref<1x128xf32, #tpu.memory_space<vmem>>, %arg7: memref<1x2x2x128xf32, #tpu.memory_space<vmem>>) attributes {dimension_semantics = [#tpu.dimension_semantics<parallel>, #tpu.dimension_semantics<parallel>, #tpu.dimension_semantics<parallel>], iteration_bounds = array<i64: 2, 1, 1>, scalar_prefetch = 0 : i64, scratch_operands = 0 : i64, tpu.core_type = #tpu.core_type<tc>, window_params = [{transform_indices = @transform_0, window_bounds = array<i64: 1, 2, 3, 64>}, {transform_indices = @transform_1, window_bounds = array<i64: 1, 1, 3, 64>}, {transform_indices = @transform_2, window_bounds = array<i64: 2, 128, 128>}, {transform_indices = @transform_3, window_bounds = array<i64: 1, 128>}, {transform_indices = @transform_4, window_bounds = array<i64: 1, 2, 2, 128>}]} {
    %c0 = arith.constant 0 : index
    %c0_0 = arith.constant 0 : index
    %c0_1 = arith.constant 0 : index
    %c0_2 = arith.constant 0 : index
    %0 = vector.load %arg3[%c0, %c0_0, %c0_1, %c0_2] : memref<1x2x3x64xf32, #tpu.memory_space<vmem>>, vector<1x2x3x64xf32>
    %1 = vector.shape_cast %0 : vector<1x2x3x64xf32> to vector<2x3x64xf32>
    %2 = vector.extract_strided_slice %1 {offsets = [1, 0, 0], sizes = [1, 3, 64], strides = [1, 1, 1]} : vector<2x3x64xf32> to vector<1x3x64xf32>
    %c0_3 = arith.constant 0 : index
    %c0_4 = arith.constant 0 : index
    %c0_5 = arith.constant 0 : index
    %c0_6 = arith.constant 0 : index
    %3 = vector.load %arg4[%c0_3, %c0_4, %c0_5, %c0_6] : memref<1x1x3x64xf32, #tpu.memory_space<vmem>>, vector<1x1x3x64xf32>
    %4 = vector.shape_cast %3 : vector<1x1x3x64xf32> to vector<1x3x64xf32>
    %5 = tpu.concatenate %2, %4 in 0 : vector<1x3x64xf32>, vector<1x3x64xf32> -> vector<2x3x64xf32>
    %cst = arith.constant 0.000000e+00 : f32
    %6 = vector.broadcast %cst : f32 to vector<4x128xf32>
    %7 = vector.extract_strided_slice %1 {offsets = [0, 0, 0], sizes = [2, 2, 64], strides = [1, 1, 1]} : vector<2x3x64xf32> to vector<2x2x64xf32>
    %8 = vector.extract_strided_slice %1 {offsets = [0, 1, 0], sizes = [2, 2, 64], strides = [1, 1, 1]} : vector<2x3x64xf32> to vector<2x2x64xf32>
    %9 = tpu.concatenate %7, %8 in 2 : vector<2x2x64xf32>, vector<2x2x64xf32> -> vector<2x2x128xf32>
    %10 = vector.shape_cast %9 : vector<2x2x128xf32> to vector<4x128xf32>
    %c0_7 = arith.constant 0 : index
    %c0_8 = arith.constant 0 : index
    %c0_9 = arith.constant 0 : index
    %11 = vector.load %arg5[%c0_7, %c0_8, %c0_9] : memref<2x128x128xf32, #tpu.memory_space<vmem>>, vector<1x128x128xf32>
    %12 = vector.shape_cast %11 : vector<1x128x128xf32> to vector<128x128xf32>
    %cst_10 = arith.constant dense<0.000000e+00> : vector<4x128xf32>
    %13 = tpu.matmul %10, %12, %cst_10 {dimension_numbers = #tpu.dot_dimension_numbers<[1], [0], [0], [1], [0, 0, 1, 1], [], []>} : vector<4x128xf32>, vector<128x128xf32>, vector<4x128xf32> -> vector<4x128xf32>
    %14 = arith.addf %6, %13 : vector<4x128xf32>
    %15 = vector.extract_strided_slice %5 {offsets = [0, 0, 0], sizes = [2, 2, 64], strides = [1, 1, 1]} : vector<2x3x64xf32> to vector<2x2x64xf32>
    %16 = vector.extract_strided_slice %5 {offsets = [0, 1, 0], sizes = [2, 2, 64], strides = [1, 1, 1]} : vector<2x3x64xf32> to vector<2x2x64xf32>
    %17 = tpu.concatenate %15, %16 in 2 : vector<2x2x64xf32>, vector<2x2x64xf32> -> vector<2x2x128xf32>
    %18 = vector.shape_cast %17 : vector<2x2x128xf32> to vector<4x128xf32>
    %c1 = arith.constant 1 : index
    %c0_11 = arith.constant 0 : index
    %c0_12 = arith.constant 0 : index
    %19 = vector.load %arg5[%c1, %c0_11, %c0_12] : memref<2x128x128xf32, #tpu.memory_space<vmem>>, vector<1x128x128xf32>
    %20 = vector.shape_cast %19 : vector<1x128x128xf32> to vector<128x128xf32>
    %cst_13 = arith.constant dense<0.000000e+00> : vector<4x128xf32>
    %21 = tpu.matmul %18, %20, %cst_13 {dimension_numbers = #tpu.dot_dimension_numbers<[1], [0], [0], [1], [0, 0, 1, 1], [], []>} : vector<4x128xf32>, vector<128x128xf32>, vector<4x128xf32> -> vector<4x128xf32>
    %22 = arith.addf %14, %21 : vector<4x128xf32>
    %c0_14 = arith.constant 0 : index
    %c0_15 = arith.constant 0 : index
    %23 = vector.load %arg6[%c0_14, %c0_15] : memref<1x128xf32, #tpu.memory_space<vmem>>, vector<1x128xf32>
    %24 = vector.broadcast %23 : vector<1x128xf32> to vector<4x128xf32>
    %25 = arith.addf %22, %24 : vector<4x128xf32>
    %cst_16 = arith.constant 0.000000e+00 : f32
    %26 = vector.broadcast %cst_16 : f32 to vector<4x128xf32>
    %27 = arith.cmpf ogt, %25, %26 : vector<4x128xf32>
    %cst_17 = arith.constant 0.00999999977 : f32
    %28 = vector.broadcast %cst_17 : f32 to vector<4x128xf32>
    %29 = arith.mulf %28, %25 : vector<4x128xf32>
    %30 = arith.select %27, %25, %29 : vector<4x128xi1>, vector<4x128xf32>
    %31 = vector.shape_cast %30 : vector<4x128xf32> to vector<2x2x128xf32>
    %c0_18 = arith.constant 0 : index
    %c0_19 = arith.constant 0 : index
    %c0_20 = arith.constant 0 : index
    %c0_21 = arith.constant 0 : index
    %32 = vector.load %arg7[%c0_18, %c0_19, %c0_20, %c0_21] : memref<1x2x2x128xf32, #tpu.memory_space<vmem>>, vector<1x2x2x128xf32>
    %33 = vector.shape_cast %32 : vector<1x2x2x128xf32> to vector<2x2x128xf32>
    %34 = vector.shape_cast %31 : vector<2x2x128xf32> to vector<1x2x2x128xf32>
    tpu.vector_store %arg7[%c0_18, %c0_19, %c0_20, %c0_21], %34 {strides = array<i32>} : memref<1x2x2x128xf32, #tpu.memory_space<vmem>>, vector<1x2x2x128xf32>,
    return
  }
  func.func @transform_0(%arg0: i32, %arg1: i32, %arg2: i32) -> (i32, i32, i32, i32) {
    %c0_i32 = arith.constant 0 : i32
    %c0_i32_0 = arith.constant 0 : i32
    %c0_i32_1 = arith.constant 0 : i32
    return %arg0, %arg1, %c0_i32, %c0_i32_0 : i32, i32, i32, i32
  }
  func.func @transform_1(%arg0: i32, %arg1: i32, %arg2: i32) -> (i32, i32, i32, i32) {
    %c1_i32 = arith.constant 1 : i32
    %0 = arith.addi %arg1, %c1_i32 : i32
    %c2_i32 = arith.constant 2 : i32
    %1 = arith.muli %0, %c2_i32 : i32
    %c0_i32 = arith.constant 0 : i32
    %c0_i32_0 = arith.constant 0 : i32
    %c0_i32_1 = arith.constant 0 : i32
    return %arg0, %1, %c0_i32, %c0_i32_0 : i32, i32, i32, i32
  }
  func.func @transform_2(%arg0: i32, %arg1: i32, %arg2: i32) -> (i32, i32, i32) {
    %c0_i32 = arith.constant 0 : i32
    %c0_i32_0 = arith.constant 0 : i32
    %c0_i32_1 = arith.constant 0 : i32
    return %c0_i32, %c0_i32_0, %arg2 : i32, i32, i32
  }
  func.func @transform_3(%arg0: i32, %arg1: i32, %arg2: i32) -> (i32, i32) {
    %c0_i32 = arith.constant 0 : i32
    %c0_i32_0 = arith.constant 0 : i32
    return %c0_i32, %arg2 : i32, i32
  }
  func.func @transform_4(%arg0: i32, %arg1: i32, %arg2: i32) -> (i32, i32, i32, i32) {
    %c0_i32 = arith.constant 0 : i32
    %c0_i32_0 = arith.constant 0 : i32
    return %arg0, %arg1, %c0_i32, %arg2 : i32, i32, i32, i32
  }
}

</mosaic_0001>

<llo_original>
// kernel: nlayer_discriminator.4
$region0: #{nlayer_discriminator.4}
  #allocation0 [shape = 'u32[]', space=smem, size = 0x4, offset = 0x4, fixed_abs, tag = 'smem constant byte address 0x4 - core index']
  #allocation1 [shape = 'u32[72,128]{1,0:T(1,128)}', space=vmem, size = 0x9000, scoped, tag = 'internal scratch']
  %s0 = inlined_call_operand.vmem [shape: f32[2,9,9,12], index: 0, kind: input, shape index: {}, may-alias: {0,1}]
  %s1 = inlined_call_operand.vmem [shape: f32[2,9,9,12], index: 1, kind: input, shape index: {}, may-alias: {0,1}]
  %s2 = inlined_call_operand.vmem [shape: f32[2,24,128], index: 2, kind: input, shape index: {}]
  %s3 = inlined_call_operand.vmem [shape: f32[1,128], index: 3, kind: input, shape index: {}]
  %s4 = inlined_call_operand.vmem [shape: f32[2,8,8,128], index: 4, kind: output, shape index: {}]
  %s5 = sld [smem:[#allocation0]]
  $region49: #{nlayer_discriminator.4} parent=0
    _
  %s7 = ssub.s32 1, %s5
  %s8 = scalar_select 0, %s7, %s5
  loop: start=0, step=1, limit=4
  $region2: #{nlayer_discriminator.4} parent=0 // loop_pre_header
    _
  $region3: #{nlayer_discriminator.4} parent=0 // loop_header
    %s10 = sphi 0, %s14
    %p11 = scmp.ge.s32.totalorder %s10, 4
    %s17 = sphi 0, %s36
    %s18 = sphi 0, %s32
    %s19 = sphi 0, %s28
    %s20 = sphi 0, %s17
    %s21 = sphi 0, %s18
    %s22 = sphi 0, %s19
    %s23 = sphi 0, %s20
    %s24 = sphi 0, %s21
    %s25 = sphi 0, %s22
    %s41 = sphi 0, %s43
    %s44 = sphi 0, %s41
    %s45 = sphi 0, %s44
    %s61 = sphi 0, %s45
    %s73 = sphi 0, %s75
    %s76 = sphi 0, %s73
    %s77 = sphi 0, %s76
    %s93 = sphi 0, %s77
    %s99 = sphi 0, %s101
    %s102 = sphi 0, %s99
    %s103 = sphi 0, %s102
    %s119 = sphi 0, %s103
    %s125 = sphi 0, %s127
    %s128 = sphi 0, %s125
    %s129 = sphi 0, %s128
    %s145 = sphi 0, %s129
    %s155 = sphi 0, %s157
    %s158 = sphi 0, %s155
    %s159 = sphi 0, %s158
    %s175 = sphi 0, %s159
  $region4: #{nlayer_discriminator.4} parent=0 // loop_header_branch
    %13 = sbr.rel (%p11) target = $region8
  $region5: #{nlayer_discriminator.4} parent=0 // loop_body
    %s15 = ssub.s32 %s10, 1
    %s16 = ssub.s32 %s10, 2
    %s26 = sadd.s32 1, %s19
    %p27 = scmp.ge.s32.totalorder %s26, 1
    %s28 = scalar_select %p27, 0, %s26
    %s29 = sadd.s32 1, %s18
    %s30 = scalar_select %p27, %s29, %s18
    %p31 = scmp.ge.s32.totalorder %s30, 1
    %s32 = scalar_select %p31, 0, %s30
    %s33 = sadd.s32 1, %s17
    %s34 = scalar_select %p31, %s33, %s17
    %p35 = scmp.ge.s32.totalorder %s34, 2
    %s36 = scalar_select %p35, 0, %s34
    %s37 = ssub.s32 %s17, %s36
    %s38 = ssub.s32 %s18, %s32
    %s39 = sor.u32 %s37, %s38
    %p40 = scmp.eq.s32.totalorder %s39, 0
    %s42 = sadd.s32 %s41, 1
    %s43 = scalar_select %p40, %s41, %s42
    %p46 = pneg %p40
    %p47 = scmp.eq.s32.totalorder %s10, 1
    %p48 = por %p46, %p47
    %p49 = scmp.ne.s32.totalorder %s41, %s44
    %p50 = scmp.eq.s32.totalorder %s10, 0
    %p51 = por %p49, %p50
    %p52 = scmp.ne.s32.totalorder %s41, %s44
    %p53 = scmp.eq.s32.totalorder %s15, 1
    %p54 = por %p52, %p53
    %p55 = scmp.ne.s32.totalorder %s44, %s45
    %p56 = scmp.eq.s32.totalorder %s15, 0
    %p57 = por %p55, %p56
    %p58 = scmp.ne.s32.totalorder %s44, %s45
    %p59 = scmp.eq.s32.totalorder %s16, 1
    %p60 = por %p58, %p59
    %p62 = scmp.ne.s32.totalorder %s45, %s61
    %p63 = scmp.eq.s32.totalorder %s16, 0
    %p64 = por %p62, %p63
    %s65 = sadd.s32 %s18, 1
    %s66 = smul.u32 %s65, 8
    %s67 = sadd.s32 %s32, 1
    %s68 = smul.u32 %s67, 8
    %s69 = ssub.s32 %s17, %s36
    %s70 = ssub.s32 %s66, %s68
    %s71 = sor.u32 %s69, %s70
    %p72 = scmp.eq.s32.totalorder %s71, 0
    %s74 = sadd.s32 %s73, 1
    %s75 = scalar_select %p72, %s73, %s74
    %p78 = pneg %p72
    %p79 = scmp.eq.s32.totalorder %s10, 1
    %p80 = por %p78, %p79
    %p81 = scmp.ne.s32.totalorder %s73, %s76
    %p82 = scmp.eq.s32.totalorder %s10, 0
    %p83 = por %p81, %p82
    %p84 = scmp.ne.s32.totalorder %s73, %s76
    %p85 = scmp.eq.s32.totalorder %s15, 1
    %p86 = por %p84, %p85
    %p87 = scmp.ne.s32.totalorder %s76, %s77
    %p88 = scmp.eq.s32.totalorder %s15, 0
    %p89 = por %p87, %p88
    %p90 = scmp.ne.s32.totalorder %s76, %s77
    %p91 = scmp.eq.s32.totalorder %s16, 1
    %p92 = por %p90, %p91
    %p94 = scmp.ne.s32.totalorder %s77, %s93
    %p95 = scmp.eq.s32.totalorder %s16, 0
    %p96 = por %p94, %p95
    %s97 = ssub.s32 %s19, %s28
    %p98 = scmp.eq.s32.totalorder %s97, 0
    %s100 = sadd.s32 %s99, 1
    %s101 = scalar_select %p98, %s99, %s100
    %p104 = pneg %p98
    %p105 = scmp.eq.s32.totalorder %s10, 1
    %p106 = por %p104, %p105
    %p107 = scmp.ne.s32.totalorder %s99, %s102
    %p108 = scmp.eq.s32.totalorder %s10, 0
    %p109 = por %p107, %p108
    %p110 = scmp.ne.s32.totalorder %s99, %s102
    %p111 = scmp.eq.s32.totalorder %s15, 1
    %p112 = por %p110, %p111
    %p113 = scmp.ne.s32.totalorder %s102, %s103
    %p114 = scmp.eq.s32.totalorder %s15, 0
    %p115 = por %p113, %p114
    %p116 = scmp.ne.s32.totalorder %s102, %s103
    %p117 = scmp.eq.s32.totalorder %s16, 1
    %p118 = por %p116, %p117
    %p120 = scmp.ne.s32.totalorder %s103, %s119
    %p121 = scmp.eq.s32.totalorder %s16, 0
    %p122 = por %p120, %p121
    %s123 = ssub.s32 %s19, %s28
    %p124 = scmp.eq.s32.totalorder %s123, 0
    %s126 = sadd.s32 %s125, 1
    %s127 = scalar_select %p124, %s125, %s126
    %p130 = pneg %p124
    %p131 = scmp.eq.s32.totalorder %s10, 1
    %p132 = por %p130, %p131
    %p133 = scmp.ne.s32.totalorder %s125, %s128
    %p134 = scmp.eq.s32.totalorder %s10, 0
    %p135 = por %p133, %p134
    %p136 = scmp.ne.s32.totalorder %s125, %s128
    %p137 = scmp.eq.s32.totalorder %s15, 1
    %p138 = por %p136, %p137
    %p139 = scmp.ne.s32.totalorder %s128, %s129
    %p140 = scmp.eq.s32.totalorder %s15, 0
    %p141 = por %p139, %p140
    %p142 = scmp.ne.s32.totalorder %s128, %s129
    %p143 = scmp.eq.s32.totalorder %s16, 1
    %p144 = por %p142, %p143
    %p146 = scmp.ne.s32.totalorder %s129, %s145
    %p147 = scmp.eq.s32.totalorder %s16, 0
    %p148 = por %p146, %p147
    %s149 = ssub.s32 %s17, %s36
    %s150 = ssub.s32 %s18, %s32
    %s151 = sor.u32 %s149, %s150
    %s152 = ssub.s32 %s19, %s28
    %s153 = sor.u32 %s151, %s152
    %p154 = scmp.eq.s32.totalorder %s153, 0
    %s156 = sadd.s32 %s155, 1
    %s157 = scalar_select %p154, %s155, %s156
    %p160 = pneg %p154
    %p161 = scmp.eq.s32.totalorder %s10, 1
    %p162 = por %p160, %p161
    %p163 = scmp.ne.s32.totalorder %s155, %s158
    %p164 = scmp.eq.s32.totalorder %s10, 0
    %p165 = por %p163, %p164
    %p166 = scmp.ne.s32.totalorder %s155, %s158
    %p167 = scmp.eq.s32.totalorder %s15, 1
    %p168 = por %p166, %p167
    %p169 = scmp.ne.s32.totalorder %s158, %s159
    %p170 = scmp.eq.s32.totalorder %s15, 0
    %p171 = por %p169, %p170
    %p172 = scmp.ne.s32.totalorder %s158, %s159
    %p173 = scmp.eq.s32.totalorder %s16, 1
    %p174 = por %p172, %p173
    %p176 = scmp.ne.s32.totalorder %s159, %s175
    %p177 = scmp.eq.s32.totalorder %s16, 0
    %p178 = por %p176, %p177
    %p179 = scmp.le.s32.totalorder 1, %s10
    %p180 = scmp.lt.s32.totalorder %s10, 3
    %p181 = pnand %p179, %p180
    %p182 = pneg %p181
    // Predicated region
    $region9: #{nlayer_discriminator.4} parent=5 // pred_check
      _
    $region10: #{nlayer_discriminator.4} parent=5 // pred_check_branch
      %184 = sbr.rel (%p181) target = $region12
    $region11: #{nlayer_discriminator.4} parent=5 // pred_region
      %s185 = ssub.s32 %s10, 1
      // Predicated region
      $region13: #{nlayer_discriminator.4} parent=11 // pred_check
        %p186 = pneg %p115
      $region14: #{nlayer_discriminator.4} parent=11 // pred_check_branch
        %188 = sbr.rel (%p186) target = $region16
      $region15: #{nlayer_discriminator.4} parent=11 // pred_region
        %p189 = scmp.lt.s32.totalorder %s22, 0
        %s190 = scalar_select %p189, %s22, 0
        %s191 = smul.addr %s190, 8
        %s192 = scalar_lea.vmem %s2, %s191
      $region16: #{nlayer_discriminator.4} parent=11 // pred_fallthru
        _
      // Predicated region
      $region17: #{nlayer_discriminator.4} parent=11 // pred_check
        %p193 = pneg %p141
      $region18: #{nlayer_discriminator.4} parent=11 // pred_check_branch
        %195 = sbr.rel (%p193) target = $region20
      $region19: #{nlayer_discriminator.4} parent=11 // pred_region
        %p196 = scmp.lt.s32.totalorder %s22, 0
        %s197 = scalar_select %p196, %s22, 0
        %s198 = scalar_lea.vmem %s3, %s197
      $region20: #{nlayer_discriminator.4} parent=11 // pred_fallthru
        _
    $region12: #{nlayer_discriminator.4} parent=5 // pred_fallthru
      _
    %p199 = scmp.lt.s32.totalorder %s10, 2
    // Predicated region
    $region21: #{nlayer_discriminator.4} parent=5 // pred_check
      %p200 = pneg %p199
    $region22: #{nlayer_discriminator.4} parent=5 // pred_check_branch
      %202 = sbr.rel (%p200) target = $region24
    $region23: #{nlayer_discriminator.4} parent=5 // pred_region
      // Predicated region
      $region25: #{nlayer_discriminator.4} parent=23 // pred_check
        %p203 = pneg %p51
      $region26: #{nlayer_discriminator.4} parent=23 // pred_check_branch
        %205 = sbr.rel (%p203) target = $region28
      $region27: #{nlayer_discriminator.4} parent=23 // pred_region
        %s206 = smul.u32 8, %s18
        %s207 = ssub.s32 9, %s206
        %p208 = scmp.lt.s32.totalorder %s207, 8
        %s209 = scalar_select %p208, %s207, 8
        %s210 = smul.u32 8, %s209
        %s211 = smul.u32 %s210, 2
        %p212 = scmp.lt.s32.totalorder %s17, 1
        %s213 = scalar_select %p212, %s17, 1
        %p214 = scmp.lt.s32.totalorder %s206, 8
        %s215 = scalar_select %p214, %s206, 8
        %s216 = smul.addr %s215, 2
        %s217 = smul.addr %s213, 18
        %s218 = sadd.s32 %s216, %s217
        %s219 = smul.addr %s218, 8
        %s220 = scalar_lea.vmem %s0, %s219
        %s221 = smul.u32 8, %s18
        %s222 = ssub.s32 9, %s221
        %p223 = scmp.lt.s32.totalorder %s222, 8
        %s224 = scalar_select %p223, %s222, 8
        %s225 = smul.u32 8, %s224
        %s226 = smul.u32 %s225, 2
      $region28: #{nlayer_discriminator.4} parent=23 // pred_fallthru
        _
      // Predicated region
      $region29: #{nlayer_discriminator.4} parent=23 // pred_check
        %p227 = pneg %p83
      $region30: #{nlayer_discriminator.4} parent=23 // pred_check_branch
        %229 = sbr.rel (%p227) target = $region32
      $region31: #{nlayer_discriminator.4} parent=23 // pred_region
        %s230 = sadd.s32 %s18, 1
        %s231 = smul.u32 %s230, 8
        %p232 = scmp.lt.s32.totalorder %s17, 1
        %s233 = scalar_select %p232, %s17, 1
        %p234 = scmp.lt.s32.totalorder %s231, 8
        %s235 = scalar_select %p234, %s231, 8
        %s236 = smul.addr %s235, 2
        %s237 = smul.addr %s233, 18
        %s238 = sadd.s32 %s236, %s237
        %s239 = smul.addr %s238, 8
        %s240 = scalar_lea.vmem %s1, %s239
        %s241 = sadd.s32 %s18, 1
        %s242 = smul.u32 %s241, 8
      $region32: #{nlayer_discriminator.4} parent=23 // pred_fallthru
        _
    $region24: #{nlayer_discriminator.4} parent=5 // pred_fallthru
      _
    %p243 = scmp.le.s32.totalorder 1, %s10
    %p244 = scmp.lt.s32.totalorder %s10, 3
    %p245 = pnand %p243, %p244
    %p246 = pneg %p245
    // Predicated region
    $region33: #{nlayer_discriminator.4} parent=5 // pred_check
      _
    $region34: #{nlayer_discriminator.4} parent=5 // pred_check_branch
      %248 = sbr.rel (%p245) target = $region36
    $region35: #{nlayer_discriminator.4} parent=5 // pred_region
      %s249 = ssub.s32 %s10, 1
      %s250 = smul.u32 8, %s21
      %s251 = ssub.s32 9, %s250
      %p252 = scmp.lt.s32.totalorder %s251, 8
      %s253 = scalar_select %p252, %s251, 8
      %s254 = smul.u32 8, %s253
      %s255 = smul.u32 %s254, 2
      %p256 = scmp.lt.s32.totalorder %s20, 1
      %s257 = scalar_select %p256, %s20, 1
      %p258 = scmp.lt.s32.totalorder %s250, 8
      %s259 = scalar_select %p258, %s250, 8
      %s260 = smul.addr %s259, 2
      %s261 = smul.addr %s257, 18
      %s262 = sadd.s32 %s260, %s261
      %s263 = smul.addr %s262, 8
      %s264 = scalar_lea.vmem %s0, %s263
      %p265 = pneg %p57
      %p266 = pneg %p54
      %s267 = sadd.s32 %s21, 1
      %s268 = smul.u32 %s267, 8
      %p269 = scmp.lt.s32.totalorder %s20, 1
      %s270 = scalar_select %p269, %s20, 1
      %p271 = scmp.lt.s32.totalorder %s268, 8
      %s272 = scalar_select %p271, %s268, 8
      %s273 = smul.addr %s272, 2
      %s274 = smul.addr %s270, 18
      %s275 = sadd.s32 %s273, %s274
      %s276 = smul.addr %s275, 8
      %s277 = scalar_lea.vmem %s1, %s276
      %p278 = pneg %p89
      %p279 = pneg %p86
      %p280 = scmp.lt.s32.totalorder %s22, 0
      %s281 = scalar_select %p280, %s22, 0
      %s282 = smul.addr %s281, 8
      %s283 = scalar_lea.vmem %s2, %s282
      %p284 = pneg %p115
      %p285 = pneg %p112
      %p286 = scmp.lt.s32.totalorder %s22, 0
      %s287 = scalar_select %p286, %s22, 0
      %s288 = scalar_lea.vmem %s3, %s287
      %p289 = pneg %p141
      %p290 = pneg %p138
      %p291 = pneg %p171
      %p292 = pneg %p168
      %s293 = smul.u32 8, %s21
      %p294 = scmp.lt.s32.totalorder %s20, 1
      %s295 = scalar_select %p294, %s20, 1
      %p296 = scmp.lt.s32.totalorder %s293, 7
      %s297 = scalar_select %p296, %s293, 7
      %p298 = scmp.lt.s32.totalorder %s22, 0
      %s299 = scalar_select %p298, %s22, 0
      %s300 = sadd.s32 %s299, %s297
      %s301 = smul.addr %s295, 8
      %s302 = sadd.s32 %s300, %s301
      %s303 = smul.addr %s302, 8
      %s304 = scalar_lea.vmem %s4, %s303
      %s305 = smul.u32 8, %s21
      %s306 = ssub.s32 9, %s305
      %p307 = scmp.lt.s32.totalorder %s306, 8
      %s308 = scalar_select %p307, %s306, 8
      %s309 = smul.u32 8, %s308
      %s310 = smul.u32 %s309, 2
      %p311 = scmp.lt.s32.totalorder %s20, 1
      %s312 = scalar_select %p311, %s20, 1
      %p313 = scmp.lt.s32.totalorder %s305, 8
      %s314 = scalar_select %p313, %s305, 8
      %s315 = smul.addr %s314, 2
      %s316 = smul.addr %s312, 18
      %s317 = sadd.s32 %s315, %s316
      %s318 = smul.addr %s317, 8
      %s319 = scalar_lea.vmem %s0, %s318
      %s320 = smul.u32 8, %s21
      %s321 = ssub.s32 9, %s320
      %p322 = scmp.lt.s32.totalorder %s321, 8
      %s323 = scalar_select %p322, %s321, 8
      %s324 = smul.u32 8, %s323
      %s325 = smul.u32 %s324, 2
      %s326 = sadd.s32 %s21, 1
      %s327 = smul.u32 %s326, 8
      %p328 = scmp.lt.s32.totalorder %s20, 1
      %s329 = scalar_select %p328, %s20, 1
      %p330 = scmp.lt.s32.totalorder %s327, 8
      %s331 = scalar_select %p330, %s327, 8
      %s332 = smul.addr %s331, 2
      %s333 = smul.addr %s329, 18
      %s334 = sadd.s32 %s332, %s333
      %s335 = smul.addr %s334, 8
      %s336 = scalar_lea.vmem %s1, %s335
      %s337 = sadd.s32 %s21, 1
      %s338 = smul.u32 %s337, 8
      %p339 = scmp.lt.s32.totalorder %s22, 0
      %s340 = scalar_select %p339, %s22, 0
      %s341 = smul.addr %s340, 8
      %s342 = scalar_lea.vmem %s2, %s341
      %p343 = scmp.lt.s32.totalorder %s22, 0
      %s344 = scalar_select %p343, %s22, 0
      %s345 = scalar_lea.vmem %s3, %s344
      %s346 = smul.u32 8, %s21
      %p347 = scmp.lt.s32.totalorder %s20, 1
      %s348 = scalar_select %p347, %s20, 1
      %p349 = scmp.lt.s32.totalorder %s346, 7
      %s350 = scalar_select %p349, %s346, 7
      %p351 = scmp.lt.s32.totalorder %s22, 0
      %s352 = scalar_select %p351, %s22, 0
      %s353 = sadd.s32 %s352, %s350
      %s354 = smul.addr %s348, 8
      %s355 = sadd.s32 %s353, %s354
      %s356 = smul.addr %s355, 8
      %s357 = scalar_lea.vmem %s4, %s356
      %s358 = smul.u32 8, %s21
      %v359 = vld [vmem:[%s319] sm:$0xff]
      %v360 = vld [vmem:[%s319 + $0x8] sm:$0x1]
      %v361 = vld [vmem:[%s319 + $0x10] sm:$0xff]
      %v362 = vld [vmem:[%s319 + $0x18] sm:$0x1]
      %v363 = vld [vmem:[%s319 + $0x20] sm:$0xff]
      %v364 = vld [vmem:[%s319 + $0x28] sm:$0x1]
      %v365 = vld [vmem:[%s319 + $0x30] sm:$0xff]
      %v366 = vld [vmem:[%s319 + $0x38] sm:$0x1]
      %v367 = vld [vmem:[%s319 + $0x40] sm:$0xff]
      %v368 = vld [vmem:[%s319 + $0x48] sm:$0x1]
      %v369 = vld [vmem:[%s319 + $0x50] sm:$0xff]
      %v370 = vld [vmem:[%s319 + $0x58] sm:$0x1]
      %v371 = vld [vmem:[%s319 + $0x60] sm:$0xff]
      %v372 = vld [vmem:[%s319 + $0x68] sm:$0x1]
      %v373 = vld [vmem:[%s319 + $0x70] sm:$0xff]
      %v374 = vld [vmem:[%s319 + $0x78] sm:$0x1]
      %v375 = vld [vmem:[%s336] sm:$0xff]
      %v376 = vld [vmem:[%s336 + $0x8] sm:$0x1]
      %vm393 = vcmask 1046528
      %v394 = vrot.slane %v359, 1
      %v395 = vrot.slane %v360, 1
      %v396 = vsel %vm393, %v394, %v395
      %v397 = vrot.slane %v361, 1
      %v398 = vrot.slane %v362, 1
      %v399 = vsel %vm393, %v397, %v398
      %v400 = vrot.slane %v363, 1
      %v401 = vrot.slane %v364, 1
      %v402 = vsel %vm393, %v400, %v401
      %v403 = vrot.slane %v365, 1
      %v404 = vrot.slane %v366, 1
      %v405 = vsel %vm393, %v403, %v404
      %v406 = vrot.slane %v367, 1
      %v407 = vrot.slane %v368, 1
      %v408 = vsel %vm393, %v406, %v407
      %v409 = vrot.slane %v369, 1
      %v410 = vrot.slane %v370, 1
      %v411 = vsel %vm393, %v409, %v410
      %v412 = vrot.slane %v371, 1
      %v413 = vrot.slane %v372, 1
      %v414 = vsel %vm393, %v412, %v413
      %v415 = vrot.slane %v373, 1
      %v416 = vrot.slane %v374, 1
      %v417 = vsel %vm393, %v415, %v416
      %418 = vrot.lane.b32.xlu0 %v396, 12
      %v419 = vpop.permute.xlu0 %418
      %420 = vrot.lane.b32.xlu0 %v399, 12
      %v421 = vpop.permute.xlu0 %420
      %422 = vrot.lane.b32.xlu0 %v402, 12
      %v423 = vpop.permute.xlu0 %422
      %424 = vrot.lane.b32.xlu0 %v405, 12
      %v425 = vpop.permute.xlu0 %424
      %426 = vrot.lane.b32.xlu0 %v408, 12
      %v427 = vpop.permute.xlu0 %426
      %428 = vrot.lane.b32.xlu0 %v411, 12
      %v429 = vpop.permute.xlu0 %428
      %430 = vrot.lane.b32.xlu0 %v414, 12
      %v431 = vpop.permute.xlu0 %430
      %432 = vrot.lane.b32.xlu0 %v417, 12
      %v433 = vpop.permute.xlu0 %432
      %vm442 = vcmask 97280
      %v443 = vsel %vm442, %v359, %v419
      %v444 = vsel %vm442, %v361, %v421
      %v445 = vsel %vm442, %v363, %v423
      %v446 = vsel %vm442, %v365, %v425
      %v447 = vsel %vm442, %v367, %v427
      %v448 = vsel %vm442, %v369, %v429
      %v449 = vsel %vm442, %v371, %v431
      %v450 = vsel %vm442, %v373, %v433
      %v451 = vld [vmem:[%s342] sm:$0xff]
      %v452 = vld [vmem:[%s342 + $0x8] sm:$0xff]
      %v453 = vld [vmem:[%s342 + $0x10] sm:$0xff]
      %v456 = vrot.slane %v375, 1
      %v457 = vrot.slane %v376, 1
      %v458 = vsel %vm393, %v456, %v457
      %459 = vrot.lane.b32.xlu0 %v458, 12
      %v460 = vpop.permute.xlu0 %459
      %v462 = vsel %vm442, %v375, %v460
      %s463 = scalar_lea.vmem %s342, 24
      %v464 = vld [vmem:[%s463] sm:$0xff]
      %v465 = vld [vmem:[%s463 + $0x8] sm:$0xff]
      %v466 = vld [vmem:[%s463 + $0x10] sm:$0xff]
      %vm467 = vcmask 195584
      %v469 = vsel %vm467, %v444, 0
      %v472 = vsel %vm467, %v445, 0
      %v475 = vsel %vm467, %v446, 0
      %v478 = vsel %vm467, %v447, 0
      %v481 = vsel %vm467, %v448, 0
      %v484 = vsel %vm467, %v449, 0
      %v487 = vsel %vm467, %v450, 0
      %v490 = vsel %vm467, %v462, 0
      %492 = vmatpush.msra.mxu0 0.0
      %493 = vmatpush.msra.mxu0 0.0
      %494 = vmatpush.msra.mxu0 0.0
      %495 = vmatpush.msra.mxu0 0.0
      %496 = vmatpush.msra.mxu0 0.0
      %497 = vmatpush.msra.mxu0 0.0
      %498 = vmatpush.msra.mxu0 0.0
      %499 = vmatpush.msra.mxu0 0.0
      %500 = vmatpush.msra.mxu0 0.0
      %501 = vmatpush.msra.mxu0 0.0
      %502 = vmatpush.msra.mxu0 0.0
      %503 = vmatpush.msra.mxu0 0.0
      %504 = vmatpush.msra.mxu0 0.0
      %505 = vmatpush.msra.mxu0 %v466
      %506 = vmatpush.msra.mxu0 %v465
      %507 = vmatpush.msra.mxu0 %v464
      %508 = vmatmul.f32.gmra.mxu0 %v469
      %v509 = vpop.f32.mrf.mxu0
      %v510 = vadd.f32 0.0, %v509
      %511 = vmatmul.f32.gmra.mxu0 %v472
      %v512 = vpop.f32.mrf.mxu0
      %v513 = vadd.f32 0.0, %v512
      %514 = vmatmul.f32.gmra.mxu0 %v475
      %v515 = vpop.f32.mrf.mxu0
      %v516 = vadd.f32 0.0, %v515
      %517 = vmatmul.f32.gmra.mxu0 %v478
      %v518 = vpop.f32.mrf.mxu0
      %v519 = vadd.f32 0.0, %v518
      %520 = vmatmul.f32.gmra.mxu0 %v481
      %v521 = vpop.f32.mrf.mxu0
      %v522 = vadd.f32 0.0, %v521
      %523 = vmatmul.f32.gmra.mxu0 %v484
      %v524 = vpop.f32.mrf.mxu0
      %v525 = vadd.f32 0.0, %v524
      %526 = vmatmul.f32.gmra.mxu0 %v487
      %v527 = vpop.f32.mrf.mxu0
      %v528 = vadd.f32 0.0, %v527
      %529 = vmatmul.f32.gmra.mxu0 %v490
      %v530 = vpop.f32.mrf.mxu0
      %v531 = vadd.f32 0.0, %v530
      %532 = vdwg.mxu0
      %v534 = vsel %vm467, %v443, 0
      %536 = vmatpush.msra.mxu0 0.0
      %537 = vmatpush.msra.mxu0 0.0
      %538 = vmatpush.msra.mxu0 0.0
      %539 = vmatpush.msra.mxu0 0.0
      %540 = vmatpush.msra.mxu0 0.0
      %541 = vmatpush.msra.mxu0 0.0
      %542 = vmatpush.msra.mxu0 0.0
      %543 = vmatpush.msra.mxu0 0.0
      %544 = vmatpush.msra.mxu0 0.0
      %545 = vmatpush.msra.mxu0 0.0
      %546 = vmatpush.msra.mxu0 0.0
      %547 = vmatpush.msra.mxu0 0.0
      %548 = vmatpush.msra.mxu0 0.0
      %549 = vmatpush.msra.mxu0 %v453
      %550 = vmatpush.msra.mxu0 %v452
      %551 = vmatpush.msra.mxu0 %v451
      %552 = vmatmul.f32.gmra.mxu0 %v534
      %v553 = vpop.f32.mrf.mxu0
      %v554 = vadd.f32 %v510, %v553
      %555 = vmatmul.f32.gmra.mxu0 %v469
      %v556 = vpop.f32.mrf.mxu0
      %v557 = vadd.f32 %v513, %v556
      %558 = vmatmul.f32.gmra.mxu0 %v472
      %v559 = vpop.f32.mrf.mxu0
      %v560 = vadd.f32 %v516, %v559
      %561 = vmatmul.f32.gmra.mxu0 %v475
      %v562 = vpop.f32.mrf.mxu0
      %v563 = vadd.f32 %v519, %v562
      %564 = vmatmul.f32.gmra.mxu0 %v478
      %v565 = vpop.f32.mrf.mxu0
      %v566 = vadd.f32 %v522, %v565
      %567 = vmatmul.f32.gmra.mxu0 %v481
      %v568 = vpop.f32.mrf.mxu0
      %v569 = vadd.f32 %v525, %v568
      %570 = vmatmul.f32.gmra.mxu0 %v484
      %v571 = vpop.f32.mrf.mxu0
      %v572 = vadd.f32 %v528, %v571
      %573 = vmatmul.f32.gmra.mxu0 %v487
      %v574 = vpop.f32.mrf.mxu0
      %v575 = vadd.f32 %v531, %v574
      %576 = vdwg.mxu0
      %v577 = vld [vmem:[%s345] sm:$0x1]
      %v579 = vperm.slane %v577, 0
      %v581 = vadd.f32 %v554, %v579
      %v582 = vadd.f32 %v557, %v579
      %v583 = vadd.f32 %v560, %v579
      %v584 = vadd.f32 %v563, %v579
      %v585 = vadd.f32 %v566, %v579
      %v586 = vadd.f32 %v569, %v579
      %v587 = vadd.f32 %v572, %v579
      %v588 = vadd.f32 %v575, %v579
      %vm589 = vcmp.gt.f32.partialorder %v581, 0.0
      %vm590 = vcmp.gt.f32.partialorder %v582, 0.0
      %vm591 = vcmp.gt.f32.partialorder %v583, 0.0
      %vm592 = vcmp.gt.f32.partialorder %v584, 0.0
      %vm593 = vcmp.gt.f32.partialorder %v585, 0.0
      %vm594 = vcmp.gt.f32.partialorder %v586, 0.0
      %vm595 = vcmp.gt.f32.partialorder %v587, 0.0
      %vm596 = vcmp.gt.f32.partialorder %v588, 0.0
      %v597 = vmul.f32 %v581, 0.01
      %v598 = vmul.f32 %v582, 0.01
      %v599 = vmul.f32 %v583, 0.01
      %v600 = vmul.f32 %v584, 0.01
      %v601 = vmul.f32 %v585, 0.01
      %v602 = vmul.f32 %v586, 0.01
      %v603 = vmul.f32 %v587, 0.01
      %v604 = vmul.f32 %v588, 0.01
      %v605 = vsel %vm589, %v581, %v597
      %v606 = vsel %vm590, %v582, %v598
      %v607 = vsel %vm591, %v583, %v599
      %v608 = vsel %vm592, %v584, %v600
      %v609 = vsel %vm593, %v585, %v601
      %v610 = vsel %vm594, %v586, %v602
      %v611 = vsel %vm595, %v587, %v603
      %v612 = vsel %vm596, %v588, %v604
      %613 = vst [vmem:[%s357] sm:$0xff] %v605
      %614 = vst [vmem:[%s357 + $0x8] sm:$0xff] %v606
      %615 = vst [vmem:[%s357 + $0x10] sm:$0xff] %v607
      %616 = vst [vmem:[%s357 + $0x18] sm:$0xff] %v608
      %617 = vst [vmem:[%s357 + $0x20] sm:$0xff] %v609
      %618 = vst [vmem:[%s357 + $0x28] sm:$0xff] %v610
      %619 = vst [vmem:[%s357 + $0x30] sm:$0xff] %v611
      %620 = vst [vmem:[%s357 + $0x38] sm:$0xff] %v612
      %s621 = smul.u32 8, %s21
      %p622 = scmp.lt.s32.totalorder %s20, 1
      %s623 = scalar_select %p622, %s20, 1
      %p624 = scmp.lt.s32.totalorder %s621, 7
      %s625 = scalar_select %p624, %s621, 7
      %p626 = scmp.lt.s32.totalorder %s22, 0
      %s627 = scalar_select %p626, %s22, 0
      %s628 = sadd.s32 %s627, %s625
      %s629 = smul.addr %s623, 8
      %s630 = sadd.s32 %s628, %s629
      %s631 = smul.addr %s630, 8
      %s632 = scalar_lea.vmem %s4, %s631
      // Predicated region
      $region37: #{nlayer_discriminator.4} parent=35 // pred_check
        %p633 = pneg %p168
      $region38: #{nlayer_discriminator.4} parent=35 // pred_check_branch
        %635 = sbr.rel (%p633) target = $region40
      $region39: #{nlayer_discriminator.4} parent=35 // pred_region
        %s636 = smul.u32 8, %s21
      $region40: #{nlayer_discriminator.4} parent=35 // pred_fallthru
        _
    $region36: #{nlayer_discriminator.4} parent=5 // pred_fallthru
      _
    %p637 = scmp.le.s32.totalorder 2, %s10
    // Predicated region
    $region41: #{nlayer_discriminator.4} parent=5 // pred_check
      %p638 = pneg %p637
    $region42: #{nlayer_discriminator.4} parent=5 // pred_check_branch
      %640 = sbr.rel (%p638) target = $region44
    $region43: #{nlayer_discriminator.4} parent=5 // pred_region
      %s641 = ssub.s32 %s10, 2
      // Predicated region
      $region45: #{nlayer_discriminator.4} parent=43 // pred_check
        %p642 = pneg %p174
      $region46: #{nlayer_discriminator.4} parent=43 // pred_check_branch
        %644 = sbr.rel (%p642) target = $region48
      $region47: #{nlayer_discriminator.4} parent=43 // pred_region
        %s645 = smul.u32 8, %s24
        %p646 = scmp.lt.s32.totalorder %s23, 1
        %s647 = scalar_select %p646, %s23, 1
        %p648 = scmp.lt.s32.totalorder %s645, 7
        %s649 = scalar_select %p648, %s645, 7
        %p650 = scmp.lt.s32.totalorder %s25, 0
        %s651 = scalar_select %p650, %s25, 0
        %s652 = sadd.s32 %s651, %s649
        %s653 = smul.addr %s647, 8
        %s654 = sadd.s32 %s652, %s653
        %s655 = smul.addr %s654, 8
        %s656 = scalar_lea.vmem %s4, %s655
      $region48: #{nlayer_discriminator.4} parent=43 // pred_fallthru
        _
    $region44: #{nlayer_discriminator.4} parent=5 // pred_fallthru
      _
  $region6: #{nlayer_discriminator.4} parent=0 // loop_footer
    %s14 = sadd.s32 1, %s10
  $region7: #{nlayer_discriminator.4} parent=0 // loop_footer_branch
    %9 = sbr.rel target = $region3
  $region8: #{nlayer_discriminator.4} parent=0 // loop_exit
    _

// kernel: nlayer_discriminator.5
$region0: #{nlayer_discriminator.5}
  #allocation0 [shape = 'u32[]', space=smem, size = 0x4, offset = 0x4, fixed_abs, tag = 'smem constant byte address 0x4 - core index']
  #allocation1 [shape = 'u32[72,128]{1,0:T(1,128)}', space=vmem, size = 0x9000, scoped, tag = 'internal scratch']
  %s0 = inlined_call_operand.vmem [shape: f32[2,5,5,32], index: 0, kind: input, shape index: {}, may-alias: {0,1}]
  %s1 = inlined_call_operand.vmem [shape: f32[2,5,5,32], index: 1, kind: input, shape index: {}, may-alias: {0,1}]
  %s2 = inlined_call_operand.vmem [shape: f32[2,64,128], index: 2, kind: input, shape index: {}]
  %s3 = inlined_call_operand.vmem [shape: f32[1,128], index: 3, kind: input, shape index: {}]
  %s4 = inlined_call_operand.vmem [shape: f32[2,4,4,128], index: 4, kind: output, shape index: {}]
  %s5 = sld [smem:[#allocation0]]
  $region49: #{nlayer_discriminator.5} parent=0
    _
  %s7 = ssub.s32 1, %s5
  %s8 = scalar_select 0, %s7, %s5
  loop: start=0, step=1, limit=4
  $region2: #{nlayer_discriminator.5} parent=0 // loop_pre_header
    _
  $region3: #{nlayer_discriminator.5} parent=0 // loop_header
    %s10 = sphi 0, %s14
    %p11 = scmp.ge.s32.totalorder %s10, 4
    %s17 = sphi 0, %s36
    %s18 = sphi 0, %s32
    %s19 = sphi 0, %s28
    %s20 = sphi 0, %s17
    %s21 = sphi 0, %s18
    %s22 = sphi 0, %s19
    %s23 = sphi 0, %s20
    %s24 = sphi 0, %s21
    %s25 = sphi 0, %s22
    %s41 = sphi 0, %s43
    %s44 = sphi 0, %s41
    %s45 = sphi 0, %s44
    %s61 = sphi 0, %s45
    %s73 = sphi 0, %s75
    %s76 = sphi 0, %s73
    %s77 = sphi 0, %s76
    %s93 = sphi 0, %s77
    %s99 = sphi 0, %s101
    %s102 = sphi 0, %s99
    %s103 = sphi 0, %s102
    %s119 = sphi 0, %s103
    %s125 = sphi 0, %s127
    %s128 = sphi 0, %s125
    %s129 = sphi 0, %s128
    %s145 = sphi 0, %s129
    %s155 = sphi 0, %s157
    %s158 = sphi 0, %s155
    %s159 = sphi 0, %s158
    %s175 = sphi 0, %s159
  $region4: #{nlayer_discriminator.5} parent=0 // loop_header_branch
    %13 = sbr.rel (%p11) target = $region8
  $region5: #{nlayer_discriminator.5} parent=0 // loop_body
    %s15 = ssub.s32 %s10, 1
    %s16 = ssub.s32 %s10, 2
    %s26 = sadd.s32 1, %s19
    %p27 = scmp.ge.s32.totalorder %s26, 1
    %s28 = scalar_select %p27, 0, %s26
    %s29 = sadd.s32 1, %s18
    %s30 = scalar_select %p27, %s29, %s18
    %p31 = scmp.ge.s32.totalorder %s30, 1
    %s32 = scalar_select %p31, 0, %s30
    %s33 = sadd.s32 1, %s17
    %s34 = scalar_select %p31, %s33, %s17
    %p35 = scmp.ge.s32.totalorder %s34, 2
    %s36 = scalar_select %p35, 0, %s34
    %s37 = ssub.s32 %s17, %s36
    %s38 = ssub.s32 %s18, %s32
    %s39 = sor.u32 %s37, %s38
    %p40 = scmp.eq.s32.totalorder %s39, 0
    %s42 = sadd.s32 %s41, 1
    %s43 = scalar_select %p40, %s41, %s42
    %p46 = pneg %p40
    %p47 = scmp.eq.s32.totalorder %s10, 1
    %p48 = por %p46, %p47
    %p49 = scmp.ne.s32.totalorder %s41, %s44
    %p50 = scmp.eq.s32.totalorder %s10, 0
    %p51 = por %p49, %p50
    %p52 = scmp.ne.s32.totalorder %s41, %s44
    %p53 = scmp.eq.s32.totalorder %s15, 1
    %p54 = por %p52, %p53
    %p55 = scmp.ne.s32.totalorder %s44, %s45
    %p56 = scmp.eq.s32.totalorder %s15, 0
    %p57 = por %p55, %p56
    %p58 = scmp.ne.s32.totalorder %s44, %s45
    %p59 = scmp.eq.s32.totalorder %s16, 1
    %p60 = por %p58, %p59
    %p62 = scmp.ne.s32.totalorder %s45, %s61
    %p63 = scmp.eq.s32.totalorder %s16, 0
    %p64 = por %p62, %p63
    %s65 = sadd.s32 %s18, 1
    %s66 = smul.u32 %s65, 4
    %s67 = sadd.s32 %s32, 1
    %s68 = smul.u32 %s67, 4
    %s69 = ssub.s32 %s17, %s36
    %s70 = ssub.s32 %s66, %s68
    %s71 = sor.u32 %s69, %s70
    %p72 = scmp.eq.s32.totalorder %s71, 0
    %s74 = sadd.s32 %s73, 1
    %s75 = scalar_select %p72, %s73, %s74
    %p78 = pneg %p72
    %p79 = scmp.eq.s32.totalorder %s10, 1
    %p80 = por %p78, %p79
    %p81 = scmp.ne.s32.totalorder %s73, %s76
    %p82 = scmp.eq.s32.totalorder %s10, 0
    %p83 = por %p81, %p82
    %p84 = scmp.ne.s32.totalorder %s73, %s76
    %p85 = scmp.eq.s32.totalorder %s15, 1
    %p86 = por %p84, %p85
    %p87 = scmp.ne.s32.totalorder %s76, %s77
    %p88 = scmp.eq.s32.totalorder %s15, 0
    %p89 = por %p87, %p88
    %p90 = scmp.ne.s32.totalorder %s76, %s77
    %p91 = scmp.eq.s32.totalorder %s16, 1
    %p92 = por %p90, %p91
    %p94 = scmp.ne.s32.totalorder %s77, %s93
    %p95 = scmp.eq.s32.totalorder %s16, 0
    %p96 = por %p94, %p95
    %s97 = ssub.s32 %s19, %s28
    %p98 = scmp.eq.s32.totalorder %s97, 0
    %s100 = sadd.s32 %s99, 1
    %s101 = scalar_select %p98, %s99, %s100
    %p104 = pneg %p98
    %p105 = scmp.eq.s32.totalorder %s10, 1
    %p106 = por %p104, %p105
    %p107 = scmp.ne.s32.totalorder %s99, %s102
    %p108 = scmp.eq.s32.totalorder %s10, 0
    %p109 = por %p107, %p108
    %p110 = scmp.ne.s32.totalorder %s99, %s102
    %p111 = scmp.eq.s32.totalorder %s15, 1
    %p112 = por %p110, %p111
    %p113 = scmp.ne.s32.totalorder %s102, %s103
    %p114 = scmp.eq.s32.totalorder %s15, 0
    %p115 = por %p113, %p114
    %p116 = scmp.ne.s32.totalorder %s102, %s103
    %p117 = scmp.eq.s32.totalorder %s16, 1
    %p118 = por %p116, %p117
    %p120 = scmp.ne.s32.totalorder %s103, %s119
    %p121 = scmp.eq.s32.totalorder %s16, 0
    %p122 = por %p120, %p121
    %s123 = ssub.s32 %s19, %s28
    %p124 = scmp.eq.s32.totalorder %s123, 0
    %s126 = sadd.s32 %s125, 1
    %s127 = scalar_select %p124, %s125, %s126
    %p130 = pneg %p124
    %p131 = scmp.eq.s32.totalorder %s10, 1
    %p132 = por %p130, %p131
    %p133 = scmp.ne.s32.totalorder %s125, %s128
    %p134 = scmp.eq.s32.totalorder %s10, 0
    %p135 = por %p133, %p134
    %p136 = scmp.ne.s32.totalorder %s125, %s128
    %p137 = scmp.eq.s32.totalorder %s15, 1
    %p138 = por %p136, %p137
    %p139 = scmp.ne.s32.totalorder %s128, %s129
    %p140 = scmp.eq.s32.totalorder %s15, 0
    %p141 = por %p139, %p140
    %p142 = scmp.ne.s32.totalorder %s128, %s129
    %p143 = scmp.eq.s32.totalorder %s16, 1
    %p144 = por %p142, %p143
    %p146 = scmp.ne.s32.totalorder %s129, %s145
    %p147 = scmp.eq.s32.totalorder %s16, 0
    %p148 = por %p146, %p147
    %s149 = ssub.s32 %s17, %s36
    %s150 = ssub.s32 %s18, %s32
    %s151 = sor.u32 %s149, %s150
    %s152 = ssub.s32 %s19, %s28
    %s153 = sor.u32 %s151, %s152
    %p154 = scmp.eq.s32.totalorder %s153, 0
    %s156 = sadd.s32 %s155, 1
    %s157 = scalar_select %p154, %s155, %s156
    %p160 = pneg %p154
    %p161 = scmp.eq.s32.totalorder %s10, 1
    %p162 = por %p160, %p161
    %p163 = scmp.ne.s32.totalorder %s155, %s158
    %p164 = scmp.eq.s32.totalorder %s10, 0
    %p165 = por %p163, %p164
    %p166 = scmp.ne.s32.totalorder %s155, %s158
    %p167 = scmp.eq.s32.totalorder %s15, 1
    %p168 = por %p166, %p167
    %p169 = scmp.ne.s32.totalorder %s158, %s159
    %p170 = scmp.eq.s32.totalorder %s15, 0
    %p171 = por %p169, %p170
    %p172 = scmp.ne.s32.totalorder %s158, %s159
    %p173 = scmp.eq.s32.totalorder %s16, 1
    %p174 = por %p172, %p173
    %p176 = scmp.ne.s32.totalorder %s159, %s175
    %p177 = scmp.eq.s32.totalorder %s16, 0
    %p178 = por %p176, %p177
    %p179 = scmp.le.s32.totalorder 1, %s10
    %p180 = scmp.lt.s32.totalorder %s10, 3
    %p181 = pnand %p179, %p180
    %p182 = pneg %p181
    // Predicated region
    $region9: #{nlayer_discriminator.5} parent=5 // pred_check
      _
    $region10: #{nlayer_discriminator.5} parent=5 // pred_check_branch
      %184 = sbr.rel (%p181) target = $region12
    $region11: #{nlayer_discriminator.5} parent=5 // pred_region
      %s185 = ssub.s32 %s10, 1
      // Predicated region
      $region13: #{nlayer_discriminator.5} parent=11 // pred_check
        %p186 = pneg %p115
      $region14: #{nlayer_discriminator.5} parent=11 // pred_check_branch
        %188 = sbr.rel (%p186) target = $region16
      $region15: #{nlayer_discriminator.5} parent=11 // pred_region
        %p189 = scmp.lt.s32.totalorder %s22, 0
        %s190 = scalar_select %p189, %s22, 0
        %s191 = smul.addr %s190, 8
        %s192 = scalar_lea.vmem %s2, %s191
      $region16: #{nlayer_discriminator.5} parent=11 // pred_fallthru
        _
      // Predicated region
      $region17: #{nlayer_discriminator.5} parent=11 // pred_check
        %p193 = pneg %p141
      $region18: #{nlayer_discriminator.5} parent=11 // pred_check_branch
        %195 = sbr.rel (%p193) target = $region20
      $region19: #{nlayer_discriminator.5} parent=11 // pred_region
        %p196 = scmp.lt.s32.totalorder %s22, 0
        %s197 = scalar_select %p196, %s22, 0
        %s198 = scalar_lea.vmem %s3, %s197
      $region20: #{nlayer_discriminator.5} parent=11 // pred_fallthru
        _
    $region12: #{nlayer_discriminator.5} parent=5 // pred_fallthru
      _
    %p199 = scmp.lt.s32.totalorder %s10, 2
    // Predicated region
    $region21: #{nlayer_discriminator.5} parent=5 // pred_check
      %p200 = pneg %p199
    $region22: #{nlayer_discriminator.5} parent=5 // pred_check_branch
      %202 = sbr.rel (%p200) target = $region24
    $region23: #{nlayer_discriminator.5} parent=5 // pred_region
      // Predicated region
      $region25: #{nlayer_discriminator.5} parent=23 // pred_check
        %p203 = pneg %p51
      $region26: #{nlayer_discriminator.5} parent=23 // pred_check_branch
        %205 = sbr.rel (%p203) target = $region28
      $region27: #{nlayer_discriminator.5} parent=23 // pred_region
        %s206 = smul.u32 4, %s18
        %s207 = ssub.s32 5, %s206
        %p208 = scmp.lt.s32.totalorder %s207, 4
        %s209 = scalar_select %p208, %s207, 4
        %s210 = smul.u32 8, %s209
        %p211 = scmp.lt.s32.totalorder %s17, 1
        %s212 = scalar_select %p211, %s17, 1
        %p213 = scmp.lt.s32.totalorder %s206, 4
        %s214 = scalar_select %p213, %s206, 4
        %s215 = smul.addr %s212, 5
        %s216 = sadd.s32 %s214, %s215
        %s217 = smul.addr %s216, 8
        %s218 = scalar_lea.vmem %s0, %s217
        %s219 = smul.u32 4, %s18
        %s220 = ssub.s32 5, %s219
        %p221 = scmp.lt.s32.totalorder %s220, 4
        %s222 = scalar_select %p221, %s220, 4
        %s223 = smul.u32 8, %s222
      $region28: #{nlayer_discriminator.5} parent=23 // pred_fallthru
        _
      // Predicated region
      $region29: #{nlayer_discriminator.5} parent=23 // pred_check
        %p224 = pneg %p83
      $region30: #{nlayer_discriminator.5} parent=23 // pred_check_branch
        %226 = sbr.rel (%p224) target = $region32
      $region31: #{nlayer_discriminator.5} parent=23 // pred_region
        %s227 = sadd.s32 %s18, 1
        %s228 = smul.u32 %s227, 4
        %p229 = scmp.lt.s32.totalorder %s17, 1
        %s230 = scalar_select %p229, %s17, 1
        %p231 = scmp.lt.s32.totalorder %s228, 4
        %s232 = scalar_select %p231, %s228, 4
        %s233 = smul.addr %s230, 5
        %s234 = sadd.s32 %s232, %s233
        %s235 = smul.addr %s234, 8
        %s236 = scalar_lea.vmem %s1, %s235
        %s237 = sadd.s32 %s18, 1
        %s238 = smul.u32 %s237, 4
      $region32: #{nlayer_discriminator.5} parent=23 // pred_fallthru
        _
    $region24: #{nlayer_discriminator.5} parent=5 // pred_fallthru
      _
    %p239 = scmp.le.s32.totalorder 1, %s10
    %p240 = scmp.lt.s32.totalorder %s10, 3
    %p241 = pnand %p239, %p240
    %p242 = pneg %p241
    // Predicated region
    $region33: #{nlayer_discriminator.5} parent=5 // pred_check
      _
    $region34: #{nlayer_discriminator.5} parent=5 // pred_check_branch
      %244 = sbr.rel (%p241) target = $region36
    $region35: #{nlayer_discriminator.5} parent=5 // pred_region
      %s245 = ssub.s32 %s10, 1
      %s246 = smul.u32 4, %s21
      %s247 = ssub.s32 5, %s246
      %p248 = scmp.lt.s32.totalorder %s247, 4
      %s249 = scalar_select %p248, %s247, 4
      %s250 = smul.u32 8, %s249
      %p251 = scmp.lt.s32.totalorder %s20, 1
      %s252 = scalar_select %p251, %s20, 1
      %p253 = scmp.lt.s32.totalorder %s246, 4
      %s254 = scalar_select %p253, %s246, 4
      %s255 = smul.addr %s252, 5
      %s256 = sadd.s32 %s254, %s255
      %s257 = smul.addr %s256, 8
      %s258 = scalar_lea.vmem %s0, %s257
      %p259 = pneg %p57
      %p260 = pneg %p54
      %s261 = sadd.s32 %s21, 1
      %s262 = smul.u32 %s261, 4
      %p263 = scmp.lt.s32.totalorder %s20, 1
      %s264 = scalar_select %p263, %s20, 1
      %p265 = scmp.lt.s32.totalorder %s262, 4
      %s266 = scalar_select %p265, %s262, 4
      %s267 = smul.addr %s264, 5
      %s268 = sadd.s32 %s266, %s267
      %s269 = smul.addr %s268, 8
      %s270 = scalar_lea.vmem %s1, %s269
      %p271 = pneg %p89
      %p272 = pneg %p86
      %p273 = scmp.lt.s32.totalorder %s22, 0
      %s274 = scalar_select %p273, %s22, 0
      %s275 = smul.addr %s274, 8
      %s276 = scalar_lea.vmem %s2, %s275
      %p277 = pneg %p115
      %p278 = pneg %p112
      %p279 = scmp.lt.s32.totalorder %s22, 0
      %s280 = scalar_select %p279, %s22, 0
      %s281 = scalar_lea.vmem %s3, %s280
      %p282 = pneg %p141
      %p283 = pneg %p138
      %p284 = pneg %p171
      %p285 = pneg %p168
      %s286 = smul.u32 4, %s21
      %p287 = scmp.lt.s32.totalorder %s20, 1
      %s288 = scalar_select %p287, %s20, 1
      %p289 = scmp.lt.s32.totalorder %s286, 3
      %s290 = scalar_select %p289, %s286, 3
      %p291 = scmp.lt.s32.totalorder %s22, 0
      %s292 = scalar_select %p291, %s22, 0
      %s293 = sadd.s32 %s292, %s290
      %s294 = smul.addr %s288, 4
      %s295 = sadd.s32 %s293, %s294
      %s296 = smul.addr %s295, 4
      %s297 = scalar_lea.vmem %s4, %s296
      %s298 = smul.u32 4, %s21
      %s299 = ssub.s32 5, %s298
      %p300 = scmp.lt.s32.totalorder %s299, 4
      %s301 = scalar_select %p300, %s299, 4
      %s302 = smul.u32 8, %s301
      %p303 = scmp.lt.s32.totalorder %s20, 1
      %s304 = scalar_select %p303, %s20, 1
      %p305 = scmp.lt.s32.totalorder %s298, 4
      %s306 = scalar_select %p305, %s298, 4
      %s307 = smul.addr %s304, 5
      %s308 = sadd.s32 %s306, %s307
      %s309 = smul.addr %s308, 8
      %s310 = scalar_lea.vmem %s0, %s309
      %s311 = smul.u32 4, %s21
      %s312 = ssub.s32 5, %s311
      %p313 = scmp.lt.s32.totalorder %s312, 4
      %s314 = scalar_select %p313, %s312, 4
      %s315 = smul.u32 8, %s314
      %s316 = sadd.s32 %s21, 1
      %s317 = smul.u32 %s316, 4
      %p318 = scmp.lt.s32.totalorder %s20, 1
      %s319 = scalar_select %p318, %s20, 1
      %p320 = scmp.lt.s32.totalorder %s317, 4
      %s321 = scalar_select %p320, %s317, 4
      %s322 = smul.addr %s319, 5
      %s323 = sadd.s32 %s321, %s322
      %s324 = smul.addr %s323, 8
      %s325 = scalar_lea.vmem %s1, %s324
      %s326 = sadd.s32 %s21, 1
      %s327 = smul.u32 %s326, 4
      %p328 = scmp.lt.s32.totalorder %s22, 0
      %s329 = scalar_select %p328, %s22, 0
      %s330 = smul.addr %s329, 8
      %s331 = scalar_lea.vmem %s2, %s330
      %p332 = scmp.lt.s32.totalorder %s22, 0
      %s333 = scalar_select %p332, %s22, 0
      %s334 = scalar_lea.vmem %s3, %s333
      %s335 = smul.u32 4, %s21
      %p336 = scmp.lt.s32.totalorder %s20, 1
      %s337 = scalar_select %p336, %s20, 1
      %p338 = scmp.lt.s32.totalorder %s335, 3
      %s339 = scalar_select %p338, %s335, 3
      %p340 = scmp.lt.s32.totalorder %s22, 0
      %s341 = scalar_select %p340, %s22, 0
      %s342 = sadd.s32 %s341, %s339
      %s343 = smul.addr %s337, 4
      %s344 = sadd.s32 %s342, %s343
      %s345 = smul.addr %s344, 4
      %s346 = scalar_lea.vmem %s4, %s345
      %s347 = smul.u32 4, %s21
      %v348 = vld [vmem:[%s310] sm:$0x1f]
      %v349 = vld [vmem:[%s310 + $0x8] sm:$0x1f]
      %v350 = vld [vmem:[%s310 + $0x10] sm:$0x1f]
      %v351 = vld [vmem:[%s310 + $0x18] sm:$0x1f]
      %v352 = vld [vmem:[%s325] sm:$0x1f]
      %v357 = vrot.slane %v348, 1
      %v358 = vrot.slane %v349, 1
      %v359 = vrot.slane %v350, 1
      %v360 = vrot.slane %v351, 1
      %361 = vrot.lane.b32.xlu0 %v357, 32
      %v362 = vpop.permute.xlu0 %361
      %363 = vrot.lane.b32.xlu0 %v358, 32
      %v364 = vpop.permute.xlu0 %363
      %365 = vrot.lane.b32.xlu0 %v359, 32
      %v366 = vpop.permute.xlu0 %365
      %367 = vrot.lane.b32.xlu0 %v360, 32
      %v368 = vpop.permute.xlu0 %367
      %vm373 = vcmask 261120
      %v374 = vsel %vm373, %v348, %v362
      %v375 = vsel %vm373, %v349, %v364
      %v376 = vsel %vm373, %v350, %v366
      %v377 = vsel %vm373, %v351, %v368
      %v378 = vld [vmem:[%s331] sm:$0xff]
      %v379 = vld [vmem:[%s331 + $0x8] sm:$0xff]
      %v380 = vld [vmem:[%s331 + $0x10] sm:$0xff]
      %v381 = vld [vmem:[%s331 + $0x18] sm:$0xff]
      %v382 = vld [vmem:[%s331 + $0x20] sm:$0xff]
      %v383 = vld [vmem:[%s331 + $0x28] sm:$0xff]
      %v384 = vld [vmem:[%s331 + $0x30] sm:$0xff]
      %v385 = vld [vmem:[%s331 + $0x38] sm:$0xff]
      %v387 = vrot.slane %v352, 1
      %388 = vrot.lane.b32.xlu0 %v387, 32
      %v389 = vpop.permute.xlu0 %388
      %v391 = vsel %vm373, %v352, %v389
      %s392 = scalar_lea.vmem %s331, 64
      %v393 = vld [vmem:[%s392] sm:$0xff]
      %v394 = vld [vmem:[%s392 + $0x8] sm:$0xff]
      %v395 = vld [vmem:[%s392 + $0x10] sm:$0xff]
      %v396 = vld [vmem:[%s392 + $0x18] sm:$0xff]
      %v397 = vld [vmem:[%s392 + $0x20] sm:$0xff]
      %v398 = vld [vmem:[%s392 + $0x28] sm:$0xff]
      %v399 = vld [vmem:[%s392 + $0x30] sm:$0xff]
      %v400 = vld [vmem:[%s392 + $0x38] sm:$0xff]
      %405 = vst [vmem:[#allocation1] ss:$2 sm:$0xff] %v375
      %s406 = scalar_lea.vmem [#allocation1], 1
      %407 = vst [vmem:[%s406] ss:$2 sm:$0xff] %v376
      %s408 = scalar_lea.vmem [#allocation1], 16
      %409 = vst [vmem:[%s408] ss:$2 sm:$0xff] %v377
      %s410 = scalar_lea.vmem [#allocation1], 17
      %411 = vst [vmem:[%s410] ss:$2 sm:$0xff] %v391
      %v412 = vld.sshfl [vmem:[#allocation1] sm:$0xff pattern:$0x75316420]
      %v413 = vld.sshfl [vmem:[#allocation1 + $0x10] sm:$0xff pattern:$0x75316420]
      %vm414 = vcmask 523264
      %v415 = vsel %vm414, %v412, 0
      %v417 = vsel %vm414, %v413, 0
      %419 = vmatpush.msra.mxu0 0.0
      %420 = vmatpush.msra.mxu0 0.0
      %421 = vmatpush.msra.mxu0 0.0
      %422 = vmatpush.msra.mxu0 0.0
      %423 = vmatpush.msra.mxu0 0.0
      %424 = vmatpush.msra.mxu0 0.0
      %425 = vmatpush.msra.mxu0 0.0
      %426 = vmatpush.msra.mxu0 0.0
      %427 = vmatpush.msra.mxu0 %v400
      %428 = vmatpush.msra.mxu0 %v399
      %429 = vmatpush.msra.mxu0 %v398
      %430 = vmatpush.msra.mxu0 %v397
      %431 = vmatpush.msra.mxu0 %v396
      %432 = vmatpush.msra.mxu0 %v395
      %433 = vmatpush.msra.mxu0 %v394
      %434 = vmatpush.msra.mxu0 %v393
      %435 = vmatmul.f32.gmra.mxu0 %v415
      %v436 = vpop.f32.mrf.mxu0
      %v437 = vadd.f32 0.0, %v436
      %438 = vmatmul.f32.gmra.mxu0 %v417
      %v439 = vpop.f32.mrf.mxu0
      %v440 = vadd.f32 0.0, %v439
      %441 = vdwg.mxu0
      %443 = vst [vmem:[#allocation1] ss:$2 sm:$0xff] %v374
      %s444 = scalar_lea.vmem [#allocation1], 1
      %445 = vst [vmem:[%s444] ss:$2 sm:$0xff] %v375
      %s446 = scalar_lea.vmem [#allocation1], 16
      %447 = vst [vmem:[%s446] ss:$2 sm:$0xff] %v376
      %s448 = scalar_lea.vmem [#allocation1], 17
      %449 = vst [vmem:[%s448] ss:$2 sm:$0xff] %v377
      %v450 = vld.sshfl [vmem:[#allocation1] sm:$0xff pattern:$0x75316420]
      %v451 = vld.sshfl [vmem:[#allocation1 + $0x10] sm:$0xff pattern:$0x75316420]
      %v452 = vsel %vm414, %v450, 0
      %v454 = vsel %vm414, %v451, 0
      %456 = vmatpush.msra.mxu0 0.0
      %457 = vmatpush.msra.mxu0 0.0
      %458 = vmatpush.msra.mxu0 0.0
      %459 = vmatpush.msra.mxu0 0.0
      %460 = vmatpush.msra.mxu0 0.0
      %461 = vmatpush.msra.mxu0 0.0
      %462 = vmatpush.msra.mxu0 0.0
      %463 = vmatpush.msra.mxu0 0.0
      %464 = vmatpush.msra.mxu0 %v385
      %465 = vmatpush.msra.mxu0 %v384
      %466 = vmatpush.msra.mxu0 %v383
      %467 = vmatpush.msra.mxu0 %v382
      %468 = vmatpush.msra.mxu0 %v381
      %469 = vmatpush.msra.mxu0 %v380
      %470 = vmatpush.msra.mxu0 %v379
      %471 = vmatpush.msra.mxu0 %v378
      %472 = vmatmul.f32.gmra.mxu0 %v452
      %v473 = vpop.f32.mrf.mxu0
      %v474 = vadd.f32 %v437, %v473
      %475 = vmatmul.f32.gmra.mxu0 %v454
      %v476 = vpop.f32.mrf.mxu0
      %v477 = vadd.f32 %v440, %v476
      %478 = vdwg.mxu0
      %v479 = vld [vmem:[%s334] sm:$0x1]
      %v481 = vperm.slane %v479, 0
      %v483 = vadd.f32 %v474, %v481
      %v484 = vadd.f32 %v477, %v481
      %vm485 = vcmp.gt.f32.partialorder %v483, 0.0
      %vm486 = vcmp.gt.f32.partialorder %v484, 0.0
      %v487 = vmul.f32 %v483, 0.01
      %v488 = vmul.f32 %v484, 0.01
      %v489 = vsel %vm485, %v483, %v487
      %v490 = vsel %vm486, %v484, %v488
      %v493 = vrot.slane %v489, 4
      %v494 = vrot.slane %v490, 4
      %497 = vst [vmem:[%s346] sm:$0xf] %v489
      %498 = vst [vmem:[%s346 + $0x4] sm:$0xf] %v493
      %499 = vst [vmem:[%s346 + $0x8] sm:$0xf] %v490
      %500 = vst [vmem:[%s346 + $0xc] sm:$0xf] %v494
      %s501 = smul.u32 4, %s21
      %p502 = scmp.lt.s32.totalorder %s20, 1
      %s503 = scalar_select %p502, %s20, 1
      %p504 = scmp.lt.s32.totalorder %s501, 3
      %s505 = scalar_select %p504, %s501, 3
      %p506 = scmp.lt.s32.totalorder %s22, 0
      %s507 = scalar_select %p506, %s22, 0
      %s508 = sadd.s32 %s507, %s505
      %s509 = smul.addr %s503, 4
      %s510 = sadd.s32 %s508, %s509
      %s511 = smul.addr %s510, 4
      %s512 = scalar_lea.vmem %s4, %s511
      // Predicated region
      $region37: #{nlayer_discriminator.5} parent=35 // pred_check
        %p513 = pneg %p168
      $region38: #{nlayer_discriminator.5} parent=35 // pred_check_branch
        %515 = sbr.rel (%p513) target = $region40
      $region39: #{nlayer_discriminator.5} parent=35 // pred_region
        %s516 = smul.u32 4, %s21
      $region40: #{nlayer_discriminator.5} parent=35 // pred_fallthru
        _
    $region36: #{nlayer_discriminator.5} parent=5 // pred_fallthru
      _
    %p517 = scmp.le.s32.totalorder 2, %s10
    // Predicated region
    $region41: #{nlayer_discriminator.5} parent=5 // pred_check
      %p518 = pneg %p517
    $region42: #{nlayer_discriminator.5} parent=5 // pred_check_branch
      %520 = sbr.rel (%p518) target = $region44
    $region43: #{nlayer_discriminator.5} parent=5 // pred_region
      %s521 = ssub.s32 %s10, 2
      // Predicated region
      $region45: #{nlayer_discriminator.5} parent=43 // pred_check
        %p522 = pneg %p174
      $region46: #{nlayer_discriminator.5} parent=43 // pred_check_branch
        %524 = sbr.rel (%p522) target = $region48
      $region47: #{nlayer_discriminator.5} parent=43 // pred_region
        %s525 = smul.u32 4, %s24
        %p526 = scmp.lt.s32.totalorder %s23, 1
        %s527 = scalar_select %p526, %s23, 1
        %p528 = scmp.lt.s32.totalorder %s525, 3
        %s529 = scalar_select %p528, %s525, 3
        %p530 = scmp.lt.s32.totalorder %s25, 0
        %s531 = scalar_select %p530, %s25, 0
        %s532 = sadd.s32 %s531, %s529
        %s533 = smul.addr %s527, 4
        %s534 = sadd.s32 %s532, %s533
        %s535 = smul.addr %s534, 4
        %s536 = scalar_lea.vmem %s4, %s535
      $region48: #{nlayer_discriminator.5} parent=43 // pred_fallthru
        _
    $region44: #{nlayer_discriminator.5} parent=5 // pred_fallthru
      _
  $region6: #{nlayer_discriminator.5} parent=0 // loop_footer
    %s14 = sadd.s32 1, %s10
  $region7: #{nlayer_discriminator.5} parent=0 // loop_footer_branch
    %9 = sbr.rel target = $region3
  $region8: #{nlayer_discriminator.5} parent=0 // loop_exit
    _

// kernel: nlayer_discriminator.7
$region0: #{nlayer_discriminator.7}
  #allocation0 [shape = 'u32[]', space=smem, size = 0x4, offset = 0x4, fixed_abs, tag = 'smem constant byte address 0x4 - core index']
  #allocation1 [shape = 'u32[72,128]{1,0:T(1,128)}', space=vmem, size = 0x9000, scoped, tag = 'internal scratch']
  %s0 = inlined_call_operand.vmem [shape: f32[2,4,4,32], index: 0, kind: input, shape index: {}]
  %s1 = inlined_call_operand.vmem [shape: f32[9,32], index: 1, kind: input, shape index: {}]
  %s2 = inlined_call_operand.hbm [shape: f32[2,2,2], index: 2, kind: output, shape index: {}]
  %s3 = sld [smem:[#allocation0]]
  $region41: #{nlayer_discriminator.7} parent=0
    _
  %s5 = ssub.s32 1, %s3
  %s6 = scalar_select 0, %s5, %s3
  $region1: #{nlayer_discriminator.7} parent=0
    #allocation2 [shape = 'u8[2048]{0}', space=vmem, size = 0x800, scoped, tag = 'output window, operand 0']
    #allocation3 [shape = 's32[2]{0}', space=sflag, size = 0x8, scoped, tag = 'scoped memory for nlayer_discriminator.7']
    %7 = vsyncpa [#allocation3], 0
    %s8 = scalar_lea.sflag [#allocation3], 1
    %9 = vsyncpa %s8, 0
    loop: start=0, step=1, limit=4
    $region2: #{nlayer_discriminator.7} parent=1 // loop_pre_header
      _
    $region3: #{nlayer_discriminator.7} parent=1 // loop_header
      %s11 = sphi 0, %s15
      %p12 = scmp.ge.s32.totalorder %s11, 4
      %s21 = sphi 0, %s23
      %s24 = sphi 0, %s21
      %s25 = sphi 0, %s24
      %s41 = sphi 0, %s25
      %s45 = sphi 0, %s45
      %s47 = sphi 0, %s45
      %s48 = sphi 0, %s47
      %s62 = sphi 0, %s48
      %s68 = sphi 0, %s70
      %s71 = sphi 0, %s68
      %s72 = sphi 0, %s71
      %s88 = sphi 0, %s72
    $region4: #{nlayer_discriminator.7} parent=1 // loop_header_branch
      %14 = sbr.rel (%p12) target = $region8
    $region5: #{nlayer_discriminator.7} parent=1 // loop_body
      %s16 = ssub.s32 %s11, 1
      %s17 = ssub.s32 %s11, 2
      %s18 = sadd.s32 %s11, 1
      %s19 = ssub.s32 %s11, %s18
      %p20 = scmp.eq.s32.totalorder %s19, 0
      %s22 = sadd.s32 %s21, 1
      %s23 = scalar_select %p20, %s21, %s22
      %p26 = pneg %p20
      %p27 = scmp.eq.s32.totalorder %s11, 1
      %p28 = por %p26, %p27
      %p29 = scmp.ne.s32.totalorder %s21, %s24
      %p30 = scmp.eq.s32.totalorder %s11, 0
      %p31 = por %p29, %p30
      %p32 = scmp.ne.s32.totalorder %s21, %s24
      %p33 = scmp.eq.s32.totalorder %s16, 1
      %p34 = por %p32, %p33
      %p35 = scmp.ne.s32.totalorder %s24, %s25
      %p36 = scmp.eq.s32.totalorder %s16, 0
      %p37 = por %p35, %p36
      %p38 = scmp.ne.s32.totalorder %s24, %s25
      %p39 = scmp.eq.s32.totalorder %s17, 1
      %p40 = por %p38, %p39
      %p42 = scmp.ne.s32.totalorder %s25, %s41
      %p43 = scmp.eq.s32.totalorder %s17, 0
      %p44 = por %p42, %p43
      %s46 = sadd.s32 %s45, 1
      %p49 = scmp.eq.s32.totalorder %s11, 1
      %p50 = scmp.ne.s32.totalorder %s45, %s47
      %p51 = scmp.eq.s32.totalorder %s11, 0
      %p52 = por %p50, %p51
      %p53 = scmp.ne.s32.totalorder %s45, %s47
      %p54 = scmp.eq.s32.totalorder %s16, 1
      %p55 = por %p53, %p54
      %p56 = scmp.ne.s32.totalorder %s47, %s48
      %p57 = scmp.eq.s32.totalorder %s16, 0
      %p58 = por %p56, %p57
      %p59 = scmp.ne.s32.totalorder %s47, %s48
      %p60 = scmp.eq.s32.totalorder %s17, 1
      %p61 = por %p59, %p60
      %p63 = scmp.ne.s32.totalorder %s48, %s62
      %p64 = scmp.eq.s32.totalorder %s17, 0
      %p65 = por %p63, %p64
      %s66 = ssub.s32 %s11, %s18
      %p67 = scmp.eq.s32.totalorder %s66, 0
      %s69 = sadd.s32 %s68, 1
      %s70 = scalar_select %p67, %s68, %s69
      %p73 = pneg %p67
      %p74 = scmp.eq.s32.totalorder %s11, 1
      %p75 = por %p73, %p74
      %p76 = scmp.ne.s32.totalorder %s68, %s71
      %p77 = scmp.eq.s32.totalorder %s11, 0
      %p78 = por %p76, %p77
      %p79 = scmp.ne.s32.totalorder %s68, %s71
      %p80 = scmp.eq.s32.totalorder %s16, 1
      %p81 = por %p79, %p80
      %p82 = scmp.ne.s32.totalorder %s71, %s72
      %p83 = scmp.eq.s32.totalorder %s16, 0
      %p84 = por %p82, %p83
      %p85 = scmp.ne.s32.totalorder %s71, %s72
      %p86 = scmp.eq.s32.totalorder %s17, 1
      %p87 = por %p85, %p86
      %p89 = scmp.ne.s32.totalorder %s72, %s88
      %p90 = scmp.eq.s32.totalorder %s17, 0
      %p91 = por %p89, %p90
      %p92 = scmp.le.s32.totalorder 1, %s11
      %p93 = scmp.lt.s32.totalorder %s11, 3
      %p94 = pnand %p92, %p93
      %p95 = pneg %p94
      // Predicated region
      $region9: #{nlayer_discriminator.7} parent=5 // pred_check
        _
      $region10: #{nlayer_discriminator.7} parent=5 // pred_check_branch
        %97 = sbr.rel (%p94) target = $region12
      $region11: #{nlayer_discriminator.7} parent=5 // pred_region
        %s98 = ssub.s32 %s11, 1
        // Predicated region
        $region13: #{nlayer_discriminator.7} parent=11 // pred_check
          %p99 = pneg %p58
        $region14: #{nlayer_discriminator.7} parent=11 // pred_check_branch
          %101 = sbr.rel (%p99) target = $region16
        $region15: #{nlayer_discriminator.7} parent=11 // pred_region
          _
        $region16: #{nlayer_discriminator.7} parent=11 // pred_fallthru
          _
      $region12: #{nlayer_discriminator.7} parent=5 // pred_fallthru
        _
      %p102 = scmp.lt.s32.totalorder %s11, 2
      // Predicated region
      $region17: #{nlayer_discriminator.7} parent=5 // pred_check
        %p103 = pneg %p102
      $region18: #{nlayer_discriminator.7} parent=5 // pred_check_branch
        %105 = sbr.rel (%p103) target = $region20
      $region19: #{nlayer_discriminator.7} parent=5 // pred_region
        // Predicated region
        $region21: #{nlayer_discriminator.7} parent=19 // pred_check
          %p106 = pneg %p31
        $region22: #{nlayer_discriminator.7} parent=19 // pred_check_branch
          %108 = sbr.rel (%p106) target = $region24
        $region23: #{nlayer_discriminator.7} parent=19 // pred_region
          %p109 = scmp.lt.s32.totalorder %s11, 1
          %s110 = scalar_select %p109, %s11, 1
          %s111 = smul.addr %s110, 4
          %s112 = smul.addr %s111, 4
          %s113 = scalar_lea.vmem %s0, %s112
        $region24: #{nlayer_discriminator.7} parent=19 // pred_fallthru
          _
      $region20: #{nlayer_discriminator.7} parent=5 // pred_fallthru
        _
      %p114 = scmp.le.s32.totalorder 1, %s11
      %p115 = scmp.lt.s32.totalorder %s11, 3
      %p116 = pnand %p114, %p115
      %p117 = pneg %p116
      // Predicated region
      $region25: #{nlayer_discriminator.7} parent=5 // pred_check
        _
      $region26: #{nlayer_discriminator.7} parent=5 // pred_check_branch
        %119 = sbr.rel (%p116) target = $region28
      $region27: #{nlayer_discriminator.7} parent=5 // pred_region
        %s120 = ssub.s32 %s11, 1
        %p121 = scmp.lt.s32.totalorder %s16, 1
        %s122 = scalar_select %p121, %s16, 1
        %s123 = smul.addr %s122, 4
        %s124 = smul.addr %s123, 4
        %s125 = scalar_lea.vmem %s0, %s124
        %p126 = pneg %p37
        %p127 = pneg %p34
        %p128 = pneg %p58
        %p129 = pneg %p55
        %p130 = pneg %p84
        %p131 = pneg %p81
        %s132 = sand.u32 %s71, 1
        %s133 = scalar_lea.sflag [#allocation3], %s132
        %s134 = sand.u32 %s71, 1
        %s135 = smul.addr %s134, 2
        %s136 = scalar_lea.vmem [#allocation2], %s135
        %p137 = scmp.lt.s32.totalorder %s16, 1
        %s138 = scalar_select %p137, %s16, 1
        %s139 = smul.addr %s138, 4
        %s140 = smul.addr %s139, 4
        %s141 = scalar_lea.vmem %s0, %s140
        %v142 = vld [vmem:[%s141] sm:$0x3]
        %v143 = vld [vmem:[%s141 + $0x4] sm:$0x3]
        %v144 = vld [vmem:[%s1] sm:$0x1]
        %v145 = vperm.slane %v144, 0
        %v146 = vmul.f32 %v142, %v145
        %v147 = vmul.f32 %v143, %v145
        %vm148 = vcmask 254976
        %v149 = vsel %vm148, %v146, 0.0
        %150 = vadd.xlane.f32.xlu0 %v149
        %v151 = vpop.xlane.xlu0 %150
        %v152 = vsel %vm148, %v147, 0.0
        %153 = vadd.xlane.f32.xlu0 %v152
        %v154 = vpop.xlane.xlu0 %153
        %v155 = vadd.f32 %v151, 0.0
        %v156 = vadd.f32 %v154, 0.0
        %v157 = vld [vmem:[%s141 + $0x1] sm:$0x3]
        %v158 = vld [vmem:[%s141 + $0x5] sm:$0x3]
        %v159 = vld [vmem:[%s1 + $0x1] sm:$0x1]
        %v160 = vperm.slane %v159, 0
        %v161 = vmul.f32 %v157, %v160
        %v162 = vmul.f32 %v158, %v160
        %v163 = vsel %vm148, %v161, 0.0
        %164 = vadd.xlane.f32.xlu0 %v163
        %v165 = vpop.xlane.xlu0 %164
        %v166 = vsel %vm148, %v162, 0.0
        %167 = vadd.xlane.f32.xlu0 %v166
        %v168 = vpop.xlane.xlu0 %167
        %v169 = vadd.f32 %v155, %v165
        %v170 = vadd.f32 %v156, %v168
        %v171 = vld [vmem:[%s141 + $0x2] sm:$0x3]
        %v172 = vld [vmem:[%s141 + $0x6] sm:$0x3]
        %v173 = vld [vmem:[%s1 + $0x2] sm:$0x1]
        %v174 = vperm.slane %v173, 0
        %v175 = vmul.f32 %v171, %v174
        %v176 = vmul.f32 %v172, %v174
        %v177 = vsel %vm148, %v175, 0.0
        %178 = vadd.xlane.f32.xlu0 %v177
        %v179 = vpop.xlane.xlu0 %178
        %v180 = vsel %vm148, %v176, 0.0
        %181 = vadd.xlane.f32.xlu0 %v180
        %v182 = vpop.xlane.xlu0 %181
        %v183 = vadd.f32 %v169, %v179
        %v184 = vadd.f32 %v170, %v182
        %s185 = scalar_lea.vmem %s141, 4
        %v186 = vld [vmem:[%s185] sm:$0x3]
        %v187 = vld [vmem:[%s185 + $0x4] sm:$0x3]
        %v188 = vld [vmem:[%s1 + $0x3] sm:$0x1]
        %v189 = vperm.slane %v188, 0
        %v190 = vmul.f32 %v186, %v189
        %v191 = vmul.f32 %v187, %v189
        %v192 = vsel %vm148, %v190, 0.0
        %193 = vadd.xlane.f32.xlu0 %v192
        %v194 = vpop.xlane.xlu0 %193
        %v195 = vsel %vm148, %v191, 0.0
        %196 = vadd.xlane.f32.xlu0 %v195
        %v197 = vpop.xlane.xlu0 %196
        %v198 = vadd.f32 %v183, %v194
        %v199 = vadd.f32 %v184, %v197
        %v200 = vld [vmem:[%s185 + $0x1] sm:$0x3]
        %v201 = vld [vmem:[%s185 + $0x5] sm:$0x3]
        %v202 = vld [vmem:[%s1 + $0x4] sm:$0x1]
        %v203 = vperm.slane %v202, 0
        %v204 = vmul.f32 %v200, %v203
        %v205 = vmul.f32 %v201, %v203
        %v206 = vsel %vm148, %v204, 0.0
        %207 = vadd.xlane.f32.xlu0 %v206
        %v208 = vpop.xlane.xlu0 %207
        %v209 = vsel %vm148, %v205, 0.0
        %210 = vadd.xlane.f32.xlu0 %v209
        %v211 = vpop.xlane.xlu0 %210
        %v212 = vadd.f32 %v198, %v208
        %v213 = vadd.f32 %v199, %v211
        %v214 = vld [vmem:[%s185 + $0x2] sm:$0x3]
        %v215 = vld [vmem:[%s185 + $0x6] sm:$0x3]
        %v216 = vld [vmem:[%s1 + $0x5] sm:$0x1]
        %v217 = vperm.slane %v216, 0
        %v218 = vmul.f32 %v214, %v217
        %v219 = vmul.f32 %v215, %v217
        %v220 = vsel %vm148, %v218, 0.0
        %221 = vadd.xlane.f32.xlu0 %v220
        %v222 = vpop.xlane.xlu0 %221
        %v223 = vsel %vm148, %v219, 0.0
        %224 = vadd.xlane.f32.xlu0 %v223
        %v225 = vpop.xlane.xlu0 %224
        %v226 = vadd.f32 %v212, %v222
        %v227 = vadd.f32 %v213, %v225
        %s228 = scalar_lea.vmem %s141, 8
        %v229 = vld [vmem:[%s228] sm:$0x3]
        %v230 = vld [vmem:[%s228 + $0x4] sm:$0x3]
        %v231 = vld [vmem:[%s1 + $0x6] sm:$0x1]
        %v232 = vperm.slane %v231, 0
        %v233 = vmul.f32 %v229, %v232
        %v234 = vmul.f32 %v230, %v232
        %v235 = vsel %vm148, %v233, 0.0
        %236 = vadd.xlane.f32.xlu0 %v235
        %v237 = vpop.xlane.xlu0 %236
        %v238 = vsel %vm148, %v234, 0.0
        %239 = vadd.xlane.f32.xlu0 %v238
        %v240 = vpop.xlane.xlu0 %239
        %v241 = vadd.f32 %v226, %v237
        %v242 = vadd.f32 %v227, %v240
        %v243 = vld [vmem:[%s228 + $0x1] sm:$0x3]
        %v244 = vld [vmem:[%s228 + $0x5] sm:$0x3]
        %v245 = vld [vmem:[%s1 + $0x7] sm:$0x1]
        %v246 = vperm.slane %v245, 0
        %v247 = vmul.f32 %v243, %v246
        %v248 = vmul.f32 %v244, %v246
        %v249 = vsel %vm148, %v247, 0.0
        %250 = vadd.xlane.f32.xlu0 %v249
        %v251 = vpop.xlane.xlu0 %250
        %v252 = vsel %vm148, %v248, 0.0
        %253 = vadd.xlane.f32.xlu0 %v252
        %v254 = vpop.xlane.xlu0 %253
        %v255 = vadd.f32 %v241, %v251
        %v256 = vadd.f32 %v242, %v254
        %v257 = vld [vmem:[%s228 + $0x2] sm:$0x3]
        %v258 = vld [vmem:[%s228 + $0x6] sm:$0x3]
        %v259 = vld [vmem:[%s1 + $0x8] sm:$0x1]
        %v260 = vperm.slane %v259, 0
        %v261 = vmul.f32 %v257, %v260
        %v262 = vmul.f32 %v258, %v260
        %v263 = vsel %vm148, %v261, 0.0
        %264 = vadd.xlane.f32.xlu0 %v263
        %v265 = vpop.xlane.xlu0 %264
        %v266 = vsel %vm148, %v262, 0.0
        %267 = vadd.xlane.f32.xlu0 %v266
        %v268 = vpop.xlane.xlu0 %267
        %v269 = vadd.f32 %v255, %v265
        %v270 = vadd.f32 %v256, %v268
        %v273 = vlaneseq
        %v274 = vand.u32 %v273, 127
        %v275 = vperm.slane %v269, %v274
        %v276 = vperm.slane %v270, %v274
        %vm277 = vcmask 1041409
        %v278 = vsel %vm277, %v276, %v275
        %vm280 = vcmask 9216
        %281 = vst.msk [vmem:[%s136] sm:$0x3] %vm280, %v278
        %s282 = sand.u32 %s71, 1
        %s283 = scalar_lea.sflag [#allocation3], %s282
        %s284 = sand.u32 %s71, 1
        %s285 = smul.addr %s284, 2
        %s286 = scalar_lea.vmem [#allocation2], %s285
        // Predicated region
        $region29: #{nlayer_discriminator.7} parent=27 // pred_check
          %p287 = pneg %p81
        $region30: #{nlayer_discriminator.7} parent=27 // pred_check_branch
          %289 = sbr.rel (%p287) target = $region32
        $region31: #{nlayer_discriminator.7} parent=27 // pred_region
          %291 = vsyncadd %s283, 0
          %s292 = smul.addr %s16, 2
          %s293 = scalar_lea.hbm %s2, %s292
          %s295 = sshll.u32 %s286, 4
          %s296 = int_to_ptr.vmem [resolvable:$true] %s295
          %s297 = sshll.u32 %s293, 4
          %s298 = int_to_ptr.hbm [resolvable:$true] %s297
          %300 = dma.vmem_to_hbm [thread:$0]  %s296, 32, %s298, %s283
        $region32: #{nlayer_discriminator.7} parent=27 // pred_fallthru
          _
      $region28: #{nlayer_discriminator.7} parent=5 // pred_fallthru
        _
      %p301 = scmp.le.s32.totalorder 2, %s11
      // Predicated region
      $region33: #{nlayer_discriminator.7} parent=5 // pred_check
        %p302 = pneg %p301
      $region34: #{nlayer_discriminator.7} parent=5 // pred_check_branch
        %304 = sbr.rel (%p302) target = $region36
      $region35: #{nlayer_discriminator.7} parent=5 // pred_region
        %s305 = ssub.s32 %s11, 2
        // Predicated region
        $region37: #{nlayer_discriminator.7} parent=35 // pred_check
          %p306 = pneg %p87
        $region38: #{nlayer_discriminator.7} parent=35 // pred_check_branch
          %308 = sbr.rel (%p306) target = $region40
        $region39: #{nlayer_discriminator.7} parent=35 // pred_region
          %s309 = sand.u32 %s72, 1
          %s310 = scalar_lea.sflag [#allocation3], %s309
          %s311 = sand.u32 %s72, 1
          %s312 = smul.addr %s311, 2
          %s313 = scalar_lea.vmem [#allocation2], %s312
          %315 = dma.done %s310, 32
        $region40: #{nlayer_discriminator.7} parent=35 // pred_fallthru
          _
      $region36: #{nlayer_discriminator.7} parent=5 // pred_fallthru
        _
    $region6: #{nlayer_discriminator.7} parent=1 // loop_footer
      %s15 = sadd.s32 1, %s11
    $region7: #{nlayer_discriminator.7} parent=1 // loop_footer_branch
      %10 = sbr.rel target = $region3
    $region8: #{nlayer_discriminator.7} parent=1 // loop_exit
      _
    %316 = vsyncpa [#allocation3], 1
    %s317 = scalar_lea.sflag [#allocation3], 1
    %318 = vsyncpa %s317, 1

// kernel: nlayer_discriminator.6
$region0: #{nlayer_discriminator.6}
  #allocation0 [shape = 'u32[]', space=smem, size = 0x4, offset = 0x4, fixed_abs, tag = 'smem constant byte address 0x4 - core index']
  #allocation1 [shape = 'u32[72,128]{1,0:T(1,128)}', space=vmem, size = 0x9000, scoped, tag = 'internal scratch']
  %s0 = inlined_call_operand.vmem [shape: f32[2,3,3,64], index: 0, kind: input, shape index: {}, may-alias: {0,1}]
  %s1 = inlined_call_operand.vmem [shape: f32[2,3,3,64], index: 1, kind: input, shape index: {}, may-alias: {0,1}]
  %s2 = inlined_call_operand.vmem [shape: f32[2,128,128], index: 2, kind: input, shape index: {}]
  %s3 = inlined_call_operand.vmem [shape: f32[1,128], index: 3, kind: input, shape index: {}]
  %s4 = inlined_call_operand.vmem [shape: f32[2,2,2,128], index: 4, kind: output, shape index: {}]
  %s5 = sld [smem:[#allocation0]]
  $region49: #{nlayer_discriminator.6} parent=0
    _
  %s7 = ssub.s32 1, %s5
  %s8 = scalar_select 0, %s7, %s5
  loop: start=0, step=1, limit=4
  $region2: #{nlayer_discriminator.6} parent=0 // loop_pre_header
    _
  $region3: #{nlayer_discriminator.6} parent=0 // loop_header
    %s10 = sphi 0, %s14
    %p11 = scmp.ge.s32.totalorder %s10, 4
    %s17 = sphi 0, %s36
    %s18 = sphi 0, %s32
    %s19 = sphi 0, %s28
    %s20 = sphi 0, %s17
    %s21 = sphi 0, %s18
    %s22 = sphi 0, %s19
    %s23 = sphi 0, %s20
    %s24 = sphi 0, %s21
    %s25 = sphi 0, %s22
    %s41 = sphi 0, %s43
    %s44 = sphi 0, %s41
    %s45 = sphi 0, %s44
    %s61 = sphi 0, %s45
    %s73 = sphi 0, %s75
    %s76 = sphi 0, %s73
    %s77 = sphi 0, %s76
    %s93 = sphi 0, %s77
    %s99 = sphi 0, %s101
    %s102 = sphi 0, %s99
    %s103 = sphi 0, %s102
    %s119 = sphi 0, %s103
    %s125 = sphi 0, %s127
    %s128 = sphi 0, %s125
    %s129 = sphi 0, %s128
    %s145 = sphi 0, %s129
    %s155 = sphi 0, %s157
    %s158 = sphi 0, %s155
    %s159 = sphi 0, %s158
    %s175 = sphi 0, %s159
  $region4: #{nlayer_discriminator.6} parent=0 // loop_header_branch
    %13 = sbr.rel (%p11) target = $region8
  $region5: #{nlayer_discriminator.6} parent=0 // loop_body
    %s15 = ssub.s32 %s10, 1
    %s16 = ssub.s32 %s10, 2
    %s26 = sadd.s32 1, %s19
    %p27 = scmp.ge.s32.totalorder %s26, 1
    %s28 = scalar_select %p27, 0, %s26
    %s29 = sadd.s32 1, %s18
    %s30 = scalar_select %p27, %s29, %s18
    %p31 = scmp.ge.s32.totalorder %s30, 1
    %s32 = scalar_select %p31, 0, %s30
    %s33 = sadd.s32 1, %s17
    %s34 = scalar_select %p31, %s33, %s17
    %p35 = scmp.ge.s32.totalorder %s34, 2
    %s36 = scalar_select %p35, 0, %s34
    %s37 = ssub.s32 %s17, %s36
    %s38 = ssub.s32 %s18, %s32
    %s39 = sor.u32 %s37, %s38
    %p40 = scmp.eq.s32.totalorder %s39, 0
    %s42 = sadd.s32 %s41, 1
    %s43 = scalar_select %p40, %s41, %s42
    %p46 = pneg %p40
    %p47 = scmp.eq.s32.totalorder %s10, 1
    %p48 = por %p46, %p47
    %p49 = scmp.ne.s32.totalorder %s41, %s44
    %p50 = scmp.eq.s32.totalorder %s10, 0
    %p51 = por %p49, %p50
    %p52 = scmp.ne.s32.totalorder %s41, %s44
    %p53 = scmp.eq.s32.totalorder %s15, 1
    %p54 = por %p52, %p53
    %p55 = scmp.ne.s32.totalorder %s44, %s45
    %p56 = scmp.eq.s32.totalorder %s15, 0
    %p57 = por %p55, %p56
    %p58 = scmp.ne.s32.totalorder %s44, %s45
    %p59 = scmp.eq.s32.totalorder %s16, 1
    %p60 = por %p58, %p59
    %p62 = scmp.ne.s32.totalorder %s45, %s61
    %p63 = scmp.eq.s32.totalorder %s16, 0
    %p64 = por %p62, %p63
    %s65 = sadd.s32 %s18, 1
    %s66 = smul.u32 %s65, 2
    %s67 = sadd.s32 %s32, 1
    %s68 = smul.u32 %s67, 2
    %s69 = ssub.s32 %s17, %s36
    %s70 = ssub.s32 %s66, %s68
    %s71 = sor.u32 %s69, %s70
    %p72 = scmp.eq.s32.totalorder %s71, 0
    %s74 = sadd.s32 %s73, 1
    %s75 = scalar_select %p72, %s73, %s74
    %p78 = pneg %p72
    %p79 = scmp.eq.s32.totalorder %s10, 1
    %p80 = por %p78, %p79
    %p81 = scmp.ne.s32.totalorder %s73, %s76
    %p82 = scmp.eq.s32.totalorder %s10, 0
    %p83 = por %p81, %p82
    %p84 = scmp.ne.s32.totalorder %s73, %s76
    %p85 = scmp.eq.s32.totalorder %s15, 1
    %p86 = por %p84, %p85
    %p87 = scmp.ne.s32.totalorder %s76, %s77
    %p88 = scmp.eq.s32.totalorder %s15, 0
    %p89 = por %p87, %p88
    %p90 = scmp.ne.s32.totalorder %s76, %s77
    %p91 = scmp.eq.s32.totalorder %s16, 1
    %p92 = por %p90, %p91
    %p94 = scmp.ne.s32.totalorder %s77, %s93
    %p95 = scmp.eq.s32.totalorder %s16, 0
    %p96 = por %p94, %p95
    %s97 = ssub.s32 %s19, %s28
    %p98 = scmp.eq.s32.totalorder %s97, 0
    %s100 = sadd.s32 %s99, 1
    %s101 = scalar_select %p98, %s99, %s100
    %p104 = pneg %p98
    %p105 = scmp.eq.s32.totalorder %s10, 1
    %p106 = por %p104, %p105
    %p107 = scmp.ne.s32.totalorder %s99, %s102
    %p108 = scmp.eq.s32.totalorder %s10, 0
    %p109 = por %p107, %p108
    %p110 = scmp.ne.s32.totalorder %s99, %s102
    %p111 = scmp.eq.s32.totalorder %s15, 1
    %p112 = por %p110, %p111
    %p113 = scmp.ne.s32.totalorder %s102, %s103
    %p114 = scmp.eq.s32.totalorder %s15, 0
    %p115 = por %p113, %p114
    %p116 = scmp.ne.s32.totalorder %s102, %s103
    %p117 = scmp.eq.s32.totalorder %s16, 1
    %p118 = por %p116, %p117
    %p120 = scmp.ne.s32.totalorder %s103, %s119
    %p121 = scmp.eq.s32.totalorder %s16, 0
    %p122 = por %p120, %p121
    %s123 = ssub.s32 %s19, %s28
    %p124 = scmp.eq.s32.totalorder %s123, 0
    %s126 = sadd.s32 %s125, 1
    %s127 = scalar_select %p124, %s125, %s126
    %p130 = pneg %p124
    %p131 = scmp.eq.s32.totalorder %s10, 1
    %p132 = por %p130, %p131
    %p133 = scmp.ne.s32.totalorder %s125, %s128
    %p134 = scmp.eq.s32.totalorder %s10, 0
    %p135 = por %p133, %p134
    %p136 = scmp.ne.s32.totalorder %s125, %s128
    %p137 = scmp.eq.s32.totalorder %s15, 1
    %p138 = por %p136, %p137
    %p139 = scmp.ne.s32.totalorder %s128, %s129
    %p140 = scmp.eq.s32.totalorder %s15, 0
    %p141 = por %p139, %p140
    %p142 = scmp.ne.s32.totalorder %s128, %s129
    %p143 = scmp.eq.s32.totalorder %s16, 1
    %p144 = por %p142, %p143
    %p146 = scmp.ne.s32.totalorder %s129, %s145
    %p147 = scmp.eq.s32.totalorder %s16, 0
    %p148 = por %p146, %p147
    %s149 = ssub.s32 %s17, %s36
    %s150 = ssub.s32 %s18, %s32
    %s151 = sor.u32 %s149, %s150
    %s152 = ssub.s32 %s19, %s28
    %s153 = sor.u32 %s151, %s152
    %p154 = scmp.eq.s32.totalorder %s153, 0
    %s156 = sadd.s32 %s155, 1
    %s157 = scalar_select %p154, %s155, %s156
    %p160 = pneg %p154
    %p161 = scmp.eq.s32.totalorder %s10, 1
    %p162 = por %p160, %p161
    %p163 = scmp.ne.s32.totalorder %s155, %s158
    %p164 = scmp.eq.s32.totalorder %s10, 0
    %p165 = por %p163, %p164
    %p166 = scmp.ne.s32.totalorder %s155, %s158
    %p167 = scmp.eq.s32.totalorder %s15, 1
    %p168 = por %p166, %p167
    %p169 = scmp.ne.s32.totalorder %s158, %s159
    %p170 = scmp.eq.s32.totalorder %s15, 0
    %p171 = por %p169, %p170
    %p172 = scmp.ne.s32.totalorder %s158, %s159
    %p173 = scmp.eq.s32.totalorder %s16, 1
    %p174 = por %p172, %p173
    %p176 = scmp.ne.s32.totalorder %s159, %s175
    %p177 = scmp.eq.s32.totalorder %s16, 0
    %p178 = por %p176, %p177
    %p179 = scmp.le.s32.totalorder 1, %s10
    %p180 = scmp.lt.s32.totalorder %s10, 3
    %p181 = pnand %p179, %p180
    %p182 = pneg %p181
    // Predicated region
    $region9: #{nlayer_discriminator.6} parent=5 // pred_check
      _
    $region10: #{nlayer_discriminator.6} parent=5 // pred_check_branch
      %184 = sbr.rel (%p181) target = $region12
    $region11: #{nlayer_discriminator.6} parent=5 // pred_region
      %s185 = ssub.s32 %s10, 1
      // Predicated region
      $region13: #{nlayer_discriminator.6} parent=11 // pred_check
        %p186 = pneg %p115
      $region14: #{nlayer_discriminator.6} parent=11 // pred_check_branch
        %188 = sbr.rel (%p186) target = $region16
      $region15: #{nlayer_discriminator.6} parent=11 // pred_region
        %p189 = scmp.lt.s32.totalorder %s22, 0
        %s190 = scalar_select %p189, %s22, 0
        %s191 = smul.addr %s190, 8
        %s192 = scalar_lea.vmem %s2, %s191
      $region16: #{nlayer_discriminator.6} parent=11 // pred_fallthru
        _
      // Predicated region
      $region17: #{nlayer_discriminator.6} parent=11 // pred_check
        %p193 = pneg %p141
      $region18: #{nlayer_discriminator.6} parent=11 // pred_check_branch
        %195 = sbr.rel (%p193) target = $region20
      $region19: #{nlayer_discriminator.6} parent=11 // pred_region
        %p196 = scmp.lt.s32.totalorder %s22, 0
        %s197 = scalar_select %p196, %s22, 0
        %s198 = scalar_lea.vmem %s3, %s197
      $region20: #{nlayer_discriminator.6} parent=11 // pred_fallthru
        _
    $region12: #{nlayer_discriminator.6} parent=5 // pred_fallthru
      _
    %p199 = scmp.lt.s32.totalorder %s10, 2
    // Predicated region
    $region21: #{nlayer_discriminator.6} parent=5 // pred_check
      %p200 = pneg %p199
    $region22: #{nlayer_discriminator.6} parent=5 // pred_check_branch
      %202 = sbr.rel (%p200) target = $region24
    $region23: #{nlayer_discriminator.6} parent=5 // pred_region
      // Predicated region
      $region25: #{nlayer_discriminator.6} parent=23 // pred_check
        %p203 = pneg %p51
      $region26: #{nlayer_discriminator.6} parent=23 // pred_check_branch
        %205 = sbr.rel (%p203) target = $region28
      $region27: #{nlayer_discriminator.6} parent=23 // pred_region
        %s206 = smul.u32 2, %s18
        %s207 = ssub.s32 3, %s206
        %p208 = scmp.lt.s32.totalorder %s207, 2
        %s209 = scalar_select %p208, %s207, 2
        %s210 = smul.u32 4, %s209
        %p211 = scmp.lt.s32.totalorder %s17, 1
        %s212 = scalar_select %p211, %s17, 1
        %p213 = scmp.lt.s32.totalorder %s206, 2
        %s214 = scalar_select %p213, %s206, 2
        %s215 = smul.addr %s212, 3
        %s216 = sadd.s32 %s214, %s215
        %s217 = smul.addr %s216, 4
        %s218 = scalar_lea.vmem %s0, %s217
        %s219 = smul.u32 2, %s18
        %s220 = ssub.s32 3, %s219
        %p221 = scmp.lt.s32.totalorder %s220, 2
        %s222 = scalar_select %p221, %s220, 2
        %s223 = smul.u32 4, %s222
      $region28: #{nlayer_discriminator.6} parent=23 // pred_fallthru
        _
      // Predicated region
      $region29: #{nlayer_discriminator.6} parent=23 // pred_check
        %p224 = pneg %p83
      $region30: #{nlayer_discriminator.6} parent=23 // pred_check_branch
        %226 = sbr.rel (%p224) target = $region32
      $region31: #{nlayer_discriminator.6} parent=23 // pred_region
        %s227 = sadd.s32 %s18, 1
        %s228 = smul.u32 %s227, 2
        %p229 = scmp.lt.s32.totalorder %s17, 1
        %s230 = scalar_select %p229, %s17, 1
        %p231 = scmp.lt.s32.totalorder %s228, 2
        %s232 = scalar_select %p231, %s228, 2
        %s233 = smul.addr %s230, 3
        %s234 = sadd.s32 %s232, %s233
        %s235 = smul.addr %s234, 4
        %s236 = scalar_lea.vmem %s1, %s235
        %s237 = sadd.s32 %s18, 1
        %s238 = smul.u32 %s237, 2
      $region32: #{nlayer_discriminator.6} parent=23 // pred_fallthru
        _
    $region24: #{nlayer_discriminator.6} parent=5 // pred_fallthru
      _
    %p239 = scmp.le.s32.totalorder 1, %s10
    %p240 = scmp.lt.s32.totalorder %s10, 3
    %p241 = pnand %p239, %p240
    %p242 = pneg %p241
    // Predicated region
    $region33: #{nlayer_discriminator.6} parent=5 // pred_check
      _
    $region34: #{nlayer_discriminator.6} parent=5 // pred_check_branch
      %244 = sbr.rel (%p241) target = $region36
    $region35: #{nlayer_discriminator.6} parent=5 // pred_region
      %s245 = ssub.s32 %s10, 1
      %s246 = smul.u32 2, %s21
      %s247 = ssub.s32 3, %s246
      %p248 = scmp.lt.s32.totalorder %s247, 2
      %s249 = scalar_select %p248, %s247, 2
      %s250 = smul.u32 4, %s249
      %p251 = scmp.lt.s32.totalorder %s20, 1
      %s252 = scalar_select %p251, %s20, 1
      %p253 = scmp.lt.s32.totalorder %s246, 2
      %s254 = scalar_select %p253, %s246, 2
      %s255 = smul.addr %s252, 3
      %s256 = sadd.s32 %s254, %s255
      %s257 = smul.addr %s256, 4
      %s258 = scalar_lea.vmem %s0, %s257
      %p259 = pneg %p57
      %p260 = pneg %p54
      %s261 = sadd.s32 %s21, 1
      %s262 = smul.u32 %s261, 2
      %p263 = scmp.lt.s32.totalorder %s20, 1
      %s264 = scalar_select %p263, %s20, 1
      %p265 = scmp.lt.s32.totalorder %s262, 2
      %s266 = scalar_select %p265, %s262, 2
      %s267 = smul.addr %s264, 3
      %s268 = sadd.s32 %s266, %s267
      %s269 = smul.addr %s268, 4
      %s270 = scalar_lea.vmem %s1, %s269
      %p271 = pneg %p89
      %p272 = pneg %p86
      %p273 = scmp.lt.s32.totalorder %s22, 0
      %s274 = scalar_select %p273, %s22, 0
      %s275 = smul.addr %s274, 8
      %s276 = scalar_lea.vmem %s2, %s275
      %p277 = pneg %p115
      %p278 = pneg %p112
      %p279 = scmp.lt.s32.totalorder %s22, 0
      %s280 = scalar_select %p279, %s22, 0
      %s281 = scalar_lea.vmem %s3, %s280
      %p282 = pneg %p141
      %p283 = pneg %p138
      %p284 = pneg %p171
      %p285 = pneg %p168
      %s286 = smul.u32 2, %s21
      %p287 = scmp.lt.s32.totalorder %s20, 1
      %s288 = scalar_select %p287, %s20, 1
      %p289 = scmp.lt.s32.totalorder %s286, 1
      %s290 = scalar_select %p289, %s286, 1
      %p291 = scmp.lt.s32.totalorder %s22, 0
      %s292 = scalar_select %p291, %s22, 0
      %s293 = sadd.s32 %s292, %s290
      %s294 = smul.addr %s288, 2
      %s295 = sadd.s32 %s293, %s294
      %s296 = smul.addr %s295, 2
      %s297 = scalar_lea.vmem %s4, %s296
      %s298 = smul.u32 2, %s21
      %s299 = ssub.s32 3, %s298
      %p300 = scmp.lt.s32.totalorder %s299, 2
      %s301 = scalar_select %p300, %s299, 2
      %s302 = smul.u32 4, %s301
      %p303 = scmp.lt.s32.totalorder %s20, 1
      %s304 = scalar_select %p303, %s20, 1
      %p305 = scmp.lt.s32.totalorder %s298, 2
      %s306 = scalar_select %p305, %s298, 2
      %s307 = smul.addr %s304, 3
      %s308 = sadd.s32 %s306, %s307
      %s309 = smul.addr %s308, 4
      %s310 = scalar_lea.vmem %s0, %s309
      %s311 = smul.u32 2, %s21
      %s312 = ssub.s32 3, %s311
      %p313 = scmp.lt.s32.totalorder %s312, 2
      %s314 = scalar_select %p313, %s312, 2
      %s315 = smul.u32 4, %s314
      %s316 = sadd.s32 %s21, 1
      %s317 = smul.u32 %s316, 2
      %p318 = scmp.lt.s32.totalorder %s20, 1
      %s319 = scalar_select %p318, %s20, 1
      %p320 = scmp.lt.s32.totalorder %s317, 2
      %s321 = scalar_select %p320, %s317, 2
      %s322 = smul.addr %s319, 3
      %s323 = sadd.s32 %s321, %s322
      %s324 = smul.addr %s323, 4
      %s325 = scalar_lea.vmem %s1, %s324
      %s326 = sadd.s32 %s21, 1
      %s327 = smul.u32 %s326, 2
      %p328 = scmp.lt.s32.totalorder %s22, 0
      %s329 = scalar_select %p328, %s22, 0
      %s330 = smul.addr %s329, 8
      %s331 = scalar_lea.vmem %s2, %s330
      %p332 = scmp.lt.s32.totalorder %s22, 0
      %s333 = scalar_select %p332, %s22, 0
      %s334 = scalar_lea.vmem %s3, %s333
      %s335 = smul.u32 2, %s21
      %p336 = scmp.lt.s32.totalorder %s20, 1
      %s337 = scalar_select %p336, %s20, 1
      %p338 = scmp.lt.s32.totalorder %s335, 1
      %s339 = scalar_select %p338, %s335, 1
      %p340 = scmp.lt.s32.totalorder %s22, 0
      %s341 = scalar_select %p340, %s22, 0
      %s342 = sadd.s32 %s341, %s339
      %s343 = smul.addr %s337, 2
      %s344 = sadd.s32 %s342, %s343
      %s345 = smul.addr %s344, 2
      %s346 = scalar_lea.vmem %s4, %s345
      %s347 = smul.u32 2, %s21
      %v348 = vld [vmem:[%s310] sm:$0x7]
      %v349 = vld [vmem:[%s310 + $0x4] sm:$0x7]
      %v350 = vld [vmem:[%s325] sm:$0x7]
      %v353 = vrot.slane %v348, 1
      %v354 = vrot.slane %v349, 1
      %355 = vrot.lane.b32.xlu0 %v353, 64
      %v356 = vpop.permute.xlu0 %355
      %357 = vrot.lane.b32.xlu0 %v354, 64
      %v358 = vpop.permute.xlu0 %357
      %vm361 = vcmask 523264
      %v362 = vsel %vm361, %v348, %v356
      %v363 = vsel %vm361, %v349, %v358
      %v364 = vld [vmem:[%s331] sm:$0xff]
      %v365 = vld [vmem:[%s331 + $0x8] sm:$0xff]
      %v366 = vld [vmem:[%s331 + $0x10] sm:$0xff]
      %v367 = vld [vmem:[%s331 + $0x18] sm:$0xff]
      %v368 = vld [vmem:[%s331 + $0x20] sm:$0xff]
      %v369 = vld [vmem:[%s331 + $0x28] sm:$0xff]
      %v370 = vld [vmem:[%s331 + $0x30] sm:$0xff]
      %v371 = vld [vmem:[%s331 + $0x38] sm:$0xff]
      %v372 = vld [vmem:[%s331 + $0x40] sm:$0xff]
      %v373 = vld [vmem:[%s331 + $0x48] sm:$0xff]
      %v374 = vld [vmem:[%s331 + $0x50] sm:$0xff]
      %v375 = vld [vmem:[%s331 + $0x58] sm:$0xff]
      %v376 = vld [vmem:[%s331 + $0x60] sm:$0xff]
      %v377 = vld [vmem:[%s331 + $0x68] sm:$0xff]
      %v378 = vld [vmem:[%s331 + $0x70] sm:$0xff]
      %v379 = vld [vmem:[%s331 + $0x78] sm:$0xff]
      %v381 = vrot.slane %v350, 1
      %382 = vrot.lane.b32.xlu0 %v381, 64
      %v383 = vpop.permute.xlu0 %382
      %v385 = vsel %vm361, %v350, %v383
      %s386 = scalar_lea.vmem %s331, 128
      %v387 = vld [vmem:[%s386] sm:$0xff]
      %v388 = vld [vmem:[%s386 + $0x8] sm:$0xff]
      %v389 = vld [vmem:[%s386 + $0x10] sm:$0xff]
      %v390 = vld [vmem:[%s386 + $0x18] sm:$0xff]
      %v391 = vld [vmem:[%s386 + $0x20] sm:$0xff]
      %v392 = vld [vmem:[%s386 + $0x28] sm:$0xff]
      %v393 = vld [vmem:[%s386 + $0x30] sm:$0xff]
      %v394 = vld [vmem:[%s386 + $0x38] sm:$0xff]
      %v395 = vld [vmem:[%s386 + $0x40] sm:$0xff]
      %v396 = vld [vmem:[%s386 + $0x48] sm:$0xff]
      %v397 = vld [vmem:[%s386 + $0x50] sm:$0xff]
      %v398 = vld [vmem:[%s386 + $0x58] sm:$0xff]
      %v399 = vld [vmem:[%s386 + $0x60] sm:$0xff]
      %v400 = vld [vmem:[%s386 + $0x68] sm:$0xff]
      %v401 = vld [vmem:[%s386 + $0x70] sm:$0xff]
      %v402 = vld [vmem:[%s386 + $0x78] sm:$0xff]
      %405 = vst [vmem:[#allocation1] ss:$4 sm:$0xff] %v363
      %s406 = scalar_lea.vmem [#allocation1], 1
      %407 = vst [vmem:[%s406] ss:$4 sm:$0xff] %v385
      %v408 = vld.sshfl [vmem:[#allocation1] sm:$0xff pattern:$0x73625140]
      %410 = vmatpush.msra.mxu0 %v402
      %411 = vmatpush.msra.mxu0 %v401
      %412 = vmatpush.msra.mxu0 %v400
      %413 = vmatpush.msra.mxu0 %v399
      %414 = vmatpush.msra.mxu0 %v398
      %415 = vmatpush.msra.mxu0 %v397
      %416 = vmatpush.msra.mxu0 %v396
      %417 = vmatpush.msra.mxu0 %v395
      %418 = vmatpush.msra.mxu0 %v394
      %419 = vmatpush.msra.mxu0 %v393
      %420 = vmatpush.msra.mxu0 %v392
      %421 = vmatpush.msra.mxu0 %v391
      %422 = vmatpush.msra.mxu0 %v390
      %423 = vmatpush.msra.mxu0 %v389
      %424 = vmatpush.msra.mxu0 %v388
      %425 = vmatpush.msra.mxu0 %v387
      %426 = vmatmul.f32.gmra.mxu0 %v408
      %v427 = vpop.f32.mrf.mxu0
      %v428 = vadd.f32 0.0, %v427
      %429 = vdwg.mxu0
      %431 = vst [vmem:[#allocation1] ss:$4 sm:$0xff] %v362
      %s432 = scalar_lea.vmem [#allocation1], 1
      %433 = vst [vmem:[%s432] ss:$4 sm:$0xff] %v363
      %v434 = vld.sshfl [vmem:[#allocation1] sm:$0xff pattern:$0x73625140]
      %436 = vmatpush.msra.mxu0 %v379
      %437 = vmatpush.msra.mxu0 %v378
      %438 = vmatpush.msra.mxu0 %v377
      %439 = vmatpush.msra.mxu0 %v376
      %440 = vmatpush.msra.mxu0 %v375
      %441 = vmatpush.msra.mxu0 %v374
      %442 = vmatpush.msra.mxu0 %v373
      %443 = vmatpush.msra.mxu0 %v372
      %444 = vmatpush.msra.mxu0 %v371
      %445 = vmatpush.msra.mxu0 %v370
      %446 = vmatpush.msra.mxu0 %v369
      %447 = vmatpush.msra.mxu0 %v368
      %448 = vmatpush.msra.mxu0 %v367
      %449 = vmatpush.msra.mxu0 %v366
      %450 = vmatpush.msra.mxu0 %v365
      %451 = vmatpush.msra.mxu0 %v364
      %452 = vmatmul.f32.gmra.mxu0 %v434
      %v453 = vpop.f32.mrf.mxu0
      %v454 = vadd.f32 %v428, %v453
      %455 = vdwg.mxu0
      %v456 = vld [vmem:[%s334] sm:$0x1]
      %v458 = vperm.slane %v456, 0
      %v460 = vadd.f32 %v454, %v458
      %vm461 = vcmp.gt.f32.partialorder %v460, 0.0
      %v462 = vmul.f32 %v460, 0.01
      %v463 = vsel %vm461, %v460, %v462
      %v465 = vrot.slane %v463, 2
      %467 = vst [vmem:[%s346] sm:$0x3] %v463
      %468 = vst [vmem:[%s346 + $0x2] sm:$0x3] %v465
      %s469 = smul.u32 2, %s21
      %p470 = scmp.lt.s32.totalorder %s20, 1
      %s471 = scalar_select %p470, %s20, 1
      %p472 = scmp.lt.s32.totalorder %s469, 1
      %s473 = scalar_select %p472, %s469, 1
      %p474 = scmp.lt.s32.totalorder %s22, 0
      %s475 = scalar_select %p474, %s22, 0
      %s476 = sadd.s32 %s475, %s473
      %s477 = smul.addr %s471, 2
      %s478 = sadd.s32 %s476, %s477
      %s479 = smul.addr %s478, 2
      %s480 = scalar_lea.vmem %s4, %s479
      // Predicated region
      $region37: #{nlayer_discriminator.6} parent=35 // pred_check
        %p481 = pneg %p168
      $region38: #{nlayer_discriminator.6} parent=35 // pred_check_branch
        %483 = sbr.rel (%p481) target = $region40
      $region39: #{nlayer_discriminator.6} parent=35 // pred_region
        %s484 = smul.u32 2, %s21
      $region40: #{nlayer_discriminator.6} parent=35 // pred_fallthru
        _
    $region36: #{nlayer_discriminator.6} parent=5 // pred_fallthru
      _
    %p485 = scmp.le.s32.totalorder 2, %s10
    // Predicated region
    $region41: #{nlayer_discriminator.6} parent=5 // pred_check
      %p486 = pneg %p485
    $region42: #{nlayer_discriminator.6} parent=5 // pred_check_branch
      %488 = sbr.rel (%p486) target = $region44
    $region43: #{nlayer_discriminator.6} parent=5 // pred_region
      %s489 = ssub.s32 %s10, 2
      // Predicated region
      $region45: #{nlayer_discriminator.6} parent=43 // pred_check
        %p490 = pneg %p174
      $region46: #{nlayer_discriminator.6} parent=43 // pred_check_branch
        %492 = sbr.rel (%p490) target = $region48
      $region47: #{nlayer_discriminator.6} parent=43 // pred_region
        %s493 = smul.u32 2, %s24
        %p494 = scmp.lt.s32.totalorder %s23, 1
        %s495 = scalar_select %p494, %s23, 1
        %p496 = scmp.lt.s32.totalorder %s493, 1
        %s497 = scalar_select %p496, %s493, 1
        %p498 = scmp.lt.s32.totalorder %s25, 0
        %s499 = scalar_select %p498, %s25, 0
        %s500 = sadd.s32 %s499, %s497
        %s501 = smul.addr %s495, 2
        %s502 = sadd.s32 %s500, %s501
        %s503 = smul.addr %s502, 2
        %s504 = scalar_lea.vmem %s4, %s503
      $region48: #{nlayer_discriminator.6} parent=43 // pred_fallthru
        _
    $region44: #{nlayer_discriminator.6} parent=5 // pred_fallthru
      _
  $region6: #{nlayer_discriminator.6} parent=0 // loop_footer
    %s14 = sadd.s32 1, %s10
  $region7: #{nlayer_discriminator.6} parent=0 // loop_footer_branch
    %9 = sbr.rel target = $region3
  $region8: #{nlayer_discriminator.6} parent=0 // loop_exit
    _

</llo_original>
